<compile_context>
chip_gen: v5e
topology: v5e:2x2
jax: 0.10.0
libtpu: 0.0.40
codegen_flags: <defaults>
</compile_context>

<pallas_src>
import numpy as np

import jax
import jax.numpy as jnp
from jax.experimental import pallas as pl
from jax.experimental.pallas import tpu as pltpu


# --------------------------- wrapper-side weight prep ----------------------- #

def _expand_conv_w(w, in_hw):
    """w: (3,3,Cin,Cout) HWIO.  Returns per-kh matrices with W stride/pad folded
    in and the zero pad columns dropped:

      m[kh, c*Cin+ci, q*Cout+co] = w[kh, s, ci, co]  with s = c - 2q + 1 in [0,3)
                                    (0 elsewhere)
    shape (3, in_hw*Cin, (in_hw//2)*Cout).
    """
    kh, kw, cin, cout = w.shape
    assert kh == 3 and kw == 3
    wo = in_hw // 2
    sel = np.zeros((in_hw, wo, 3), np.float32)
    for q in range(wo):
        for s in range(3):
            c = 2 * q - 1 + s
            if 0 <= c < in_hw:
                sel[c, q, s] = 1.0
    m = jnp.einsum("cqs,rsio->rciqo", jnp.asarray(sel), w)
    return m.reshape(3, in_hw * cin, wo * cout)


# --------------------------------- kernel ----------------------------------- #

def _convnet_kernel(xw_ref,
                    w1_ref, b1_ref, m2_ref, b2_ref, m3_ref, b3_ref,
                    wp1_ref, bl1_ref, wl2_ref, bl2_ref,
                    out_ref,
                    x2_scr, x3_scr):
    f32 = jnp.float32
    bsz = xw_ref.shape[0]                 # images per grid step

    def mm(a, b):
        return jnp.dot(a, b, preferred_element_type=f32)

    # Only the pad-border rows that are read but never written need zeroing.
    # Done every step (scratch is per-core; never gate this on program_id==0).
    x2_scr[:, 0:1, :] = jnp.zeros((bsz, 1, 256), f32)
    x3_scr[:, 0:1, :] = jnp.zeros((bsz, 1, 128), f32)

    # ---- conv1 + relu: 32x32x3 -> 16x16x16 as ONE (B*16, 288) @ (288, 256) ----
    a = xw_ref[...].reshape(bsz * 16, 288)
    o1 = jnp.maximum(mm(a, w1_ref[...]) + b1_ref[...], 0.0)
    o1 = o1.reshape(bsz, 16, 256)
    # Wrapper ordered conv1 output rows [h = 0,2,...,14 | h = 1,3,...,15].
    # conv2-padded-row p = h + 1, so these two halves land contiguously in the
    # parity-grouped conv2 input scratch:
    #   x2_scr rows: [0] = pad row 0,  [1:9] = pad rows 2,4,...,16,
    #                [9:17] = pad rows 1,3,...,15
    x2_scr[:, 9:17, :] = o1[:, 0:8, :]     # even h  -> odd padded rows
    x2_scr[:, 1:9, :] = o1[:, 8:16, :]     # odd  h  -> even padded rows

    # ---- conv2 + relu: 16x16x16 -> 8x8x16, three (B*8, 256) @ (256, 128) ------
    a0 = x2_scr[:, 0:8, :].reshape(bsz * 8, 256)     # padded rows 2h'
    a2 = x2_scr[:, 1:9, :].reshape(bsz * 8, 256)     # padded rows 2h'+2
    a1 = x2_scr[:, 9:17, :].reshape(bsz * 8, 256)    # padded rows 2h'+1
    o2 = mm(a0, m2_ref[0]) + mm(a1, m2_ref[1]) + mm(a2, m2_ref[2])
    o2 = jnp.maximum(o2 + b2_ref[...], 0.0).reshape(bsz, 8, 128)
    # Parity-scatter (8 static lane-aligned row stores) into conv3 input scratch:
    #   x3_scr rows: [0] = pad row 0, [1:5] = pad rows 2,4,6,8, [5:9] = pad rows 1,3,5,7
    for i in range(4):
        x3_scr[:, 1 + i:2 + i, :] = o2[:, 2 * i + 1:2 * i + 2, :]   # odd  h' -> even pad rows
        x3_scr[:, 5 + i:6 + i, :] = o2[:, 2 * i:2 * i + 1, :]       # even h' -> odd  pad rows

    # ---- conv3 + relu: 8x8x16 -> 4x4x10, three (B*4, 128) @ (128, 40) ---------
    c0 = x3_scr[:, 0:4, :].reshape(bsz * 4, 128)     # padded rows 2h''
    c2 = x3_scr[:, 1:5, :].reshape(bsz * 4, 128)     # padded rows 2h''+2
    c1 = x3_scr[:, 5:9, :].reshape(bsz * 4, 128)     # padded rows 2h''+1
    o3 = mm(c0, m3_ref[0]) + mm(c1, m3_ref[1]) + mm(c2, m3_ref[2])
    o3 = jnp.maximum(o3 + b3_ref[...], 0.0)          # (B*4, 40) = (b*4+h, w*10+c)

    # ---- avg_pool2d(4) folded into linear1 (wp1 = tile(wl1, 4) / 16) ----------
    rs = jnp.sum(o3.reshape(bsz, 4, 40), axis=1)                      # (B, 40)
    h1 = jnp.maximum(mm(rs, wp1_ref[...]) + bl1_ref[...], 0.0)        # (B, 2*out)
    out = mm(h1, wl2_ref[...]) + bl2_ref[...]                         # (B, out_pad)

    out_ref[0, :, :] = out                 # lane-dense (B, 128+) store


# --------------------------------- wrapper ---------------------------------- #

def convnet_forward(params, x_nchw, *, block_b=None):
    """Matches ConvNet.forward (inference; dropout = identity)."""
    n, c, h, w = x_nchw.shape
    assert (c, h, w) == (3, 32, 32), "kernel is specialised for (3, 32, 32) inputs"
    out_dim = params["wl2"].shape[1]
    hd = 2 * out_dim
    out_pad = max(128, ((out_dim + 127) // 128) * 128)    # lane-dense output width

    # Images per grid step (sweep 16-64 at large N); keep grid length >= 2 for
    # megacore when the batch allows it.
    if block_b is None:
        block_b = 16 if n >= 32 else max(1, n // 2)
    block_b = max(1, min(block_b, n))
    num_blocks = -(-n // block_b)
    n_pad = num_blocks * block_b

    # ---- input prep: NCHW -> NHWC, flatten rows to (col, chan) lanes (no W pad),
    # pad H by 1, then H-only im2row with output rows ordered [even h | odd h].
    x = jnp.transpose(x_nchw, (0, 2, 3, 1)).reshape(n, 32, 96)
    xp = jnp.pad(x, ((0, 0), (1, 1), (0, 0)))                         # (N, 34, 96)
    h_order = np.concatenate([np.arange(0, 16, 2), np.arange(1, 16, 2)])
    row_idx = (2 * h_order)[:, None] + np.arange(3)[None, :]          # (16, 3) padded-row taps
    xw = xp[:, row_idx, :].reshape(n, 16, 288)
    if n_pad != n:
        xw = jnp.pad(xw, ((0, n_pad - n), (0, 0), (0, 0)))

    # ---- weight prep (all wrapper-side, tiny) ----
    m1 = _expand_conv_w(params["w1"], 32)                 # (3,  96, 256)
    w1c = m1.reshape(288, 256)                            # kh taps stacked along K
    b1t = jnp.tile(params["b1"], 16).reshape(1, 256)
    m2 = _expand_conv_w(params["w2"], 16)                 # (3, 256, 128)
    b2t = jnp.tile(params["b2"], 8).reshape(1, 128)
    m3 = _expand_conv_w(params["w3"], 8)                  # (3, 128, 40)
    b3t = jnp.tile(params["b3"], 4).reshape(1, 40)
    wp1 = jnp.tile(params["wl1"], (4, 1)) * (1.0 / 16.0)  # avg-pool folded into linear1
    bl1 = params["bl1"].reshape(1, hd)
    wl2p = jnp.pad(params["wl2"], ((0, 0), (0, out_pad - out_dim)))
    bl2p = jnp.pad(params["bl2"], (0, out_pad - out_dim)).reshape(1, out_pad)

    grid_spec = pltpu.PrefetchScalarGridSpec(
        num_scalar_prefetch=0,
        grid=(num_blocks,),
        in_specs=[
            pl.BlockSpec((block_b, 16, 288), lambda i: (i, 0, 0)),   # im2row input
            pl.BlockSpec((288, 256), lambda i: (0, 0)),              # conv1 W (taps stacked)
            pl.BlockSpec((1, 256), lambda i: (0, 0)),                # conv1 bias (tiled)
            pl.BlockSpec((3, 256, 128), lambda i: (0, 0, 0)),        # conv2 W per tap
            pl.BlockSpec((1, 128), lambda i: (0, 0)),                # conv2 bias (tiled)
            pl.BlockSpec((3, 128, 40), lambda i: (0, 0, 0)),         # conv3 W per tap
            pl.BlockSpec((1, 40), lambda i: (0, 0)),                 # conv3 bias (tiled)
            pl.BlockSpec((40, hd), lambda i: (0, 0)),                # pool+linear1 W
            pl.BlockSpec((1, hd), lambda i: (0, 0)),                 # linear1 bias
            pl.BlockSpec((hd, out_pad), lambda i: (0, 0)),           # linear2 W (lane-padded)
            pl.BlockSpec((1, out_pad), lambda i: (0, 0)),            # linear2 bias (lane-padded)
        ],
        out_specs=pl.BlockSpec((1, block_b, out_pad), lambda i: (i, 0, 0)),
        scratch_shapes=[
            pltpu.VMEM((block_b, 17, 256), jnp.float32),   # conv2 input, parity-grouped
            pltpu.VMEM((block_b, 9, 128), jnp.float32),    # conv3 input, parity-grouped
        ],
    )

    out = pl.pallas_call(
        _convnet_kernel,
        out_shape=jax.ShapeDtypeStruct((num_blocks, block_b, out_pad), jnp.float32),
        grid_spec=grid_spec,
        compiler_params=pltpu.CompilerParams(dimension_semantics=("parallel",)),
    )(xw, w1c, b1t, m2, b2t, m3, b3t, wp1, bl1, wl2p, bl2p)

    return out.reshape(n_pad, out_pad)[:n, :out_dim]


# ------------------------------ init & reference ---------------------------- #

def init_params(key, output_dim):
    ks = jax.random.split(key, 10)

    def conv_w(k, cin, cout):
        scale = 1.0 / jnp.sqrt(3.0 * 3.0 * cin)
        return jax.random.uniform(k, (3, 3, cin, cout), jnp.float32, -scale, scale)

    def lin_w(k, cin, cout):
        scale = 1.0 / jnp.sqrt(float(cin))
        return jax.random.uniform(k, (cin, cout), jnp.float32, -scale, scale)

    def bias(k, m):
        return jax.random.uniform(k, (m,), jnp.float32, -0.1, 0.1)

    return {
        "w1": conv_w(ks[0], 3, 16), "b1": bias(ks[1], 16),
        "w2": conv_w(ks[2], 16, 16), "b2": bias(ks[3], 16),
        "w3": conv_w(ks[4], 16, 10), "b3": bias(ks[5], 10),
        "wl1": lin_w(ks[6], 10, 2 * output_dim), "bl1": bias(ks[7], 2 * output_dim),
        "wl2": lin_w(ks[8], 2 * output_dim, output_dim), "bl2": bias(ks[9], output_dim),
    }


def convnet_forward_ref(params, x_nchw):
    """Pure-JAX reference (lax conv)."""
    x = jnp.transpose(x_nchw, (0, 2, 3, 1))

    def conv(x, w, b):
        y = jax.lax.conv_general_dilated(
            x, w, window_strides=(2, 2), padding=((1, 1), (1, 1)),
            dimension_numbers=("NHWC", "HWIO", "NHWC"))
        return jnp.maximum(y + b, 0.0)

    x = conv(x, params["w1"], params["b1"])
    x = conv(x, params["w2"], params["b2"])
    x = conv(x, params["w3"], params["b3"])
    x = jnp.mean(x, axis=(1, 2))                 # avg_pool2d(4) on an exactly-4x4 map
    x = jnp.maximum(x @ params["wl1"] + params["bl1"], 0.0)
    x = x @ params["wl2"] + params["bl2"]
    return x


# ----------------------------------- main ------------------------------------ #

if __name__ == "__main__":
    key = jax.random.PRNGKey(0)
    k_params, k_x = jax.random.split(key)

    output_dim = 8
    batch = 8
    # 32x32 images: 32 -> 16 -> 8 -> 4 spatial, then avg_pool2d(4) -> 1x1.
    x = jax.random.normal(k_x, (batch, 3, 32, 32), dtype=jnp.float32)   # NCHW like PyTorch
    params = init_params(k_params, output_dim)

    # Default block_b for batch=8 is 4 -> grid=(2,), exercising the batched
    # per-step path and the megacore ("parallel") grid sharding.
    fwd = jax.jit(convnet_forward)
    ref_fwd = jax.jit(convnet_forward_ref)

    out = jax.block_until_ready(fwd(params, x))
    ref = jax.block_until_ready(ref_fwd(params, x))

    assert out.shape == (batch, output_dim), out.shape
    assert bool(jnp.all(jnp.isfinite(out)))
    # Tight f32-level tolerance (both paths accumulate in f32 on the MXU).
    assert bool(jnp.allclose(out, ref, rtol=1e-4, atol=1e-4)), (out, ref)

    print("KERNEL_OK")
</pallas_src>

<mosaic_0001>
module attributes {stable_mosaic.version = 11 : i64} {
  func.func @_convnet_kernel(%arg0: i32, %arg1: memref<4x16x288xf32, #tpu.memory_space<vmem>>, %arg2: memref<288x256xf32, #tpu.memory_space<vmem>>, %arg3: memref<1x256xf32, #tpu.memory_space<vmem>>, %arg4: memref<3x256x128xf32, #tpu.memory_space<vmem>>, %arg5: memref<1x128xf32, #tpu.memory_space<vmem>>, %arg6: memref<3x128x40xf32, #tpu.memory_space<vmem>>, %arg7: memref<1x40xf32, #tpu.memory_space<vmem>>, %arg8: memref<40x16xf32, #tpu.memory_space<vmem>>, %arg9: memref<1x16xf32, #tpu.memory_space<vmem>>, %arg10: memref<16x128xf32, #tpu.memory_space<vmem>>, %arg11: memref<1x128xf32, #tpu.memory_space<vmem>>, %arg12: memref<1x4x128xf32, #tpu.memory_space<vmem>>, %arg13: memref<4x17x256xf32, #tpu.memory_space<vmem>>, %arg14: memref<4x9x128xf32, #tpu.memory_space<vmem>>) attributes {dimension_semantics = [#tpu.dimension_semantics<parallel>], iteration_bounds = array<i64: 2>, scalar_prefetch = 0 : i64, scratch_operands = 2 : i64, tpu.core_type = #tpu.core_type<tc>, window_params = [{transform_indices = @transform_0, window_bounds = array<i64: 4, 16, 288>}, {pipeline_mode = #tpu.pipeline_mode<synchronous>, transform_indices = @transform_1, window_bounds = array<i64: 288, 256>}, {pipeline_mode = #tpu.pipeline_mode<synchronous>, transform_indices = @transform_2, window_bounds = array<i64: 1, 256>}, {pipeline_mode = #tpu.pipeline_mode<synchronous>, transform_indices = @transform_3, window_bounds = array<i64: 3, 256, 128>}, {pipeline_mode = #tpu.pipeline_mode<synchronous>, transform_indices = @transform_4, window_bounds = array<i64: 1, 128>}, {pipeline_mode = #tpu.pipeline_mode<synchronous>, transform_indices = @transform_5, window_bounds = array<i64: 3, 128, 40>}, {pipeline_mode = #tpu.pipeline_mode<synchronous>, transform_indices = @transform_6, window_bounds = array<i64: 1, 40>}, {pipeline_mode = #tpu.pipeline_mode<synchronous>, transform_indices = @transform_7, window_bounds = array<i64: 40, 16>}, {pipeline_mode = #tpu.pipeline_mode<synchronous>, transform_indices = @transform_8, window_bounds = array<i64: 1, 16>}, {pipeline_mode = #tpu.pipeline_mode<synchronous>, transform_indices = @transform_9, window_bounds = array<i64: 16, 128>}, {pipeline_mode = #tpu.pipeline_mode<synchronous>, transform_indices = @transform_10, window_bounds = array<i64: 1, 128>}, {transform_indices = @transform_11, window_bounds = array<i64: 1, 4, 128>}]} {
    %cst = arith.constant 0.000000e+00 : f32
    %0 = vector.broadcast %cst : f32 to vector<4x1x256xf32>
    %c0 = arith.constant 0 : index
    %c0_0 = arith.constant 0 : index
    %c0_1 = arith.constant 0 : index
    %1 = vector.load %arg13[%c0, %c0_0, %c0_1] : memref<4x17x256xf32, #tpu.memory_space<vmem>>, vector<4x1x256xf32>
    tpu.vector_store %arg13[%c0, %c0_0, %c0_1], %0 {strides = array<i32>} : memref<4x17x256xf32, #tpu.memory_space<vmem>>, vector<4x1x256xf32>,
    %cst_2 = arith.constant 0.000000e+00 : f32
    %2 = vector.broadcast %cst_2 : f32 to vector<4x1x128xf32>
    %c0_3 = arith.constant 0 : index
    %c0_4 = arith.constant 0 : index
    %c0_5 = arith.constant 0 : index
    %3 = vector.load %arg14[%c0_3, %c0_4, %c0_5] : memref<4x9x128xf32, #tpu.memory_space<vmem>>, vector<4x1x128xf32>
    tpu.vector_store %arg14[%c0_3, %c0_4, %c0_5], %2 {strides = array<i32>} : memref<4x9x128xf32, #tpu.memory_space<vmem>>, vector<4x1x128xf32>,
    %c0_6 = arith.constant 0 : index
    %c0_7 = arith.constant 0 : index
    %c0_8 = arith.constant 0 : index
    %4 = vector.load %arg1[%c0_6, %c0_7, %c0_8] : memref<4x16x288xf32, #tpu.memory_space<vmem>>, vector<4x16x288xf32>
    %5 = vector.shape_cast %4 : vector<4x16x288xf32> to vector<64x288xf32>
    %c0_9 = arith.constant 0 : index
    %c0_10 = arith.constant 0 : index
    %6 = vector.load %arg2[%c0_9, %c0_10] : memref<288x256xf32, #tpu.memory_space<vmem>>, vector<288x256xf32>
    %cst_11 = arith.constant dense<0.000000e+00> : vector<64x256xf32>
    %7 = tpu.matmul %5, %6, %cst_11 {dimension_numbers = #tpu.dot_dimension_numbers<[1], [0], [0], [1], [0, 0, 1, 1], [], []>} : vector<64x288xf32>, vector<288x256xf32>, vector<64x256xf32> -> vector<64x256xf32>
    %c0_12 = arith.constant 0 : index
    %c0_13 = arith.constant 0 : index
    %8 = vector.load %arg3[%c0_12, %c0_13] : memref<1x256xf32, #tpu.memory_space<vmem>>, vector<1x256xf32>
    %9 = vector.broadcast %8 : vector<1x256xf32> to vector<64x256xf32>
    %10 = arith.addf %7, %9 : vector<64x256xf32>
    %cst_14 = arith.constant 0.000000e+00 : f32
    %11 = vector.broadcast %cst_14 : f32 to vector<64x256xf32>
    %12 = arith.maximumf %10, %11 : vector<64x256xf32>
    %13 = vector.shape_cast %12 : vector<64x256xf32> to vector<4x16x256xf32>
    %14 = vector.extract_strided_slice %13 {offsets = [0, 0, 0], sizes = [4, 8, 256], strides = [1, 1, 1]} : vector<4x16x256xf32> to vector<4x8x256xf32>
    %c0_15 = arith.constant 0 : index
    %c9 = arith.constant 9 : index
    %c0_16 = arith.constant 0 : index
    %15 = vector.load %arg13[%c0_15, %c9, %c0_16] : memref<4x17x256xf32, #tpu.memory_space<vmem>>, vector<4x8x256xf32>
    tpu.vector_store %arg13[%c0_15, %c9, %c0_16], %14 {strides = array<i32>} : memref<4x17x256xf32, #tpu.memory_space<vmem>>, vector<4x8x256xf32>,
    %16 = vector.extract_strided_slice %13 {offsets = [0, 8, 0], sizes = [4, 8, 256], strides = [1, 1, 1]} : vector<4x16x256xf32> to vector<4x8x256xf32>
    %c0_17 = arith.constant 0 : index
    %c1 = arith.constant 1 : index
    %c0_18 = arith.constant 0 : index
    %17 = vector.load %arg13[%c0_17, %c1, %c0_18] : memref<4x17x256xf32, #tpu.memory_space<vmem>>, vector<4x8x256xf32>
    tpu.vector_store %arg13[%c0_17, %c1, %c0_18], %16 {strides = array<i32>} : memref<4x17x256xf32, #tpu.memory_space<vmem>>, vector<4x8x256xf32>,
    %c0_19 = arith.constant 0 : index
    %c0_20 = arith.constant 0 : index
    %c0_21 = arith.constant 0 : index
    %18 = vector.load %arg13[%c0_19, %c0_20, %c0_21] : memref<4x17x256xf32, #tpu.memory_space<vmem>>, vector<4x8x256xf32>
    %19 = vector.shape_cast %18 : vector<4x8x256xf32> to vector<32x256xf32>
    %c0_22 = arith.constant 0 : index
    %c1_23 = arith.constant 1 : index
    %c0_24 = arith.constant 0 : index
    %20 = vector.load %arg13[%c0_22, %c1_23, %c0_24] : memref<4x17x256xf32, #tpu.memory_space<vmem>>, vector<4x8x256xf32>
    %21 = vector.shape_cast %20 : vector<4x8x256xf32> to vector<32x256xf32>
    %c0_25 = arith.constant 0 : index
    %c9_26 = arith.constant 9 : index
    %c0_27 = arith.constant 0 : index
    %22 = vector.load %arg13[%c0_25, %c9_26, %c0_27] : memref<4x17x256xf32, #tpu.memory_space<vmem>>, vector<4x8x256xf32>
    %23 = vector.shape_cast %22 : vector<4x8x256xf32> to vector<32x256xf32>
    %c0_28 = arith.constant 0 : index
    %c0_29 = arith.constant 0 : index
    %c0_30 = arith.constant 0 : index
    %24 = vector.load %arg4[%c0_28, %c0_29, %c0_30] : memref<3x256x128xf32, #tpu.memory_space<vmem>>, vector<1x256x128xf32>
    %25 = vector.shape_cast %24 : vector<1x256x128xf32> to vector<256x128xf32>
    %cst_31 = arith.constant dense<0.000000e+00> : vector<32x128xf32>
    %26 = tpu.matmul %19, %25, %cst_31 {dimension_numbers = #tpu.dot_dimension_numbers<[1], [0], [0], [1], [0, 0, 1, 1], [], []>} : vector<32x256xf32>, vector<256x128xf32>, vector<32x128xf32> -> vector<32x128xf32>
    %c1_32 = arith.constant 1 : index
    %c0_33 = arith.constant 0 : index
    %c0_34 = arith.constant 0 : index
    %27 = vector.load %arg4[%c1_32, %c0_33, %c0_34] : memref<3x256x128xf32, #tpu.memory_space<vmem>>, vector<1x256x128xf32>
    %28 = vector.shape_cast %27 : vector<1x256x128xf32> to vector<256x128xf32>
    %cst_35 = arith.constant dense<0.000000e+00> : vector<32x128xf32>
    %29 = tpu.matmul %23, %28, %cst_35 {dimension_numbers = #tpu.dot_dimension_numbers<[1], [0], [0], [1], [0, 0, 1, 1], [], []>} : vector<32x256xf32>, vector<256x128xf32>, vector<32x128xf32> -> vector<32x128xf32>
    %30 = arith.addf %26, %29 : vector<32x128xf32>
    %c2 = arith.constant 2 : index
    %c0_36 = arith.constant 0 : index
    %c0_37 = arith.constant 0 : index
    %31 = vector.load %arg4[%c2, %c0_36, %c0_37] : memref<3x256x128xf32, #tpu.memory_space<vmem>>, vector<1x256x128xf32>
    %32 = vector.shape_cast %31 : vector<1x256x128xf32> to vector<256x128xf32>
    %cst_38 = arith.constant dense<0.000000e+00> : vector<32x128xf32>
    %33 = tpu.matmul %21, %32, %cst_38 {dimension_numbers = #tpu.dot_dimension_numbers<[1], [0], [0], [1], [0, 0, 1, 1], [], []>} : vector<32x256xf32>, vector<256x128xf32>, vector<32x128xf32> -> vector<32x128xf32>
    %34 = arith.addf %30, %33 : vector<32x128xf32>
    %c0_39 = arith.constant 0 : index
    %c0_40 = arith.constant 0 : index
    %35 = vector.load %arg5[%c0_39, %c0_40] : memref<1x128xf32, #tpu.memory_space<vmem>>, vector<1x128xf32>
    %36 = vector.broadcast %35 : vector<1x128xf32> to vector<32x128xf32>
    %37 = arith.addf %34, %36 : vector<32x128xf32>
    %cst_41 = arith.constant 0.000000e+00 : f32
    %38 = vector.broadcast %cst_41 : f32 to vector<32x128xf32>
    %39 = arith.maximumf %37, %38 : vector<32x128xf32>
    %40 = vector.shape_cast %39 : vector<32x128xf32> to vector<4x8x128xf32>
    %41 = vector.extract_strided_slice %40 {offsets = [0, 1, 0], sizes = [4, 1, 128], strides = [1, 1, 1]} : vector<4x8x128xf32> to vector<4x1x128xf32>
    %c0_42 = arith.constant 0 : index
    %c1_43 = arith.constant 1 : index
    %c0_44 = arith.constant 0 : index
    %42 = vector.load %arg14[%c0_42, %c1_43, %c0_44] : memref<4x9x128xf32, #tpu.memory_space<vmem>>, vector<4x1x128xf32>
    tpu.vector_store %arg14[%c0_42, %c1_43, %c0_44], %41 {strides = array<i32>} : memref<4x9x128xf32, #tpu.memory_space<vmem>>, vector<4x1x128xf32>,
    %43 = vector.extract_strided_slice %40 {offsets = [0, 0, 0], sizes = [4, 1, 128], strides = [1, 1, 1]} : vector<4x8x128xf32> to vector<4x1x128xf32>
    %c0_45 = arith.constant 0 : index
    %c5 = arith.constant 5 : index
    %c0_46 = arith.constant 0 : index
    %44 = vector.load %arg14[%c0_45, %c5, %c0_46] : memref<4x9x128xf32, #tpu.memory_space<vmem>>, vector<4x1x128xf32>
    tpu.vector_store %arg14[%c0_45, %c5, %c0_46], %43 {strides = array<i32>} : memref<4x9x128xf32, #tpu.memory_space<vmem>>, vector<4x1x128xf32>,
    %45 = vector.extract_strided_slice %40 {offsets = [0, 3, 0], sizes = [4, 1, 128], strides = [1, 1, 1]} : vector<4x8x128xf32> to vector<4x1x128xf32>
    %c0_47 = arith.constant 0 : index
    %c2_48 = arith.constant 2 : index
    %c0_49 = arith.constant 0 : index
    %46 = vector.load %arg14[%c0_47, %c2_48, %c0_49] : memref<4x9x128xf32, #tpu.memory_space<vmem>>, vector<4x1x128xf32>
    tpu.vector_store %arg14[%c0_47, %c2_48, %c0_49], %45 {strides = array<i32>} : memref<4x9x128xf32, #tpu.memory_space<vmem>>, vector<4x1x128xf32>,
    %47 = vector.extract_strided_slice %40 {offsets = [0, 2, 0], sizes = [4, 1, 128], strides = [1, 1, 1]} : vector<4x8x128xf32> to vector<4x1x128xf32>
    %c0_50 = arith.constant 0 : index
    %c6 = arith.constant 6 : index
    %c0_51 = arith.constant 0 : index
    %48 = vector.load %arg14[%c0_50, %c6, %c0_51] : memref<4x9x128xf32, #tpu.memory_space<vmem>>, vector<4x1x128xf32>
    tpu.vector_store %arg14[%c0_50, %c6, %c0_51], %47 {strides = array<i32>} : memref<4x9x128xf32, #tpu.memory_space<vmem>>, vector<4x1x128xf32>,
    %49 = vector.extract_strided_slice %40 {offsets = [0, 5, 0], sizes = [4, 1, 128], strides = [1, 1, 1]} : vector<4x8x128xf32> to vector<4x1x128xf32>
    %c0_52 = arith.constant 0 : index
    %c3 = arith.constant 3 : index
    %c0_53 = arith.constant 0 : index
    %50 = vector.load %arg14[%c0_52, %c3, %c0_53] : memref<4x9x128xf32, #tpu.memory_space<vmem>>, vector<4x1x128xf32>
    tpu.vector_store %arg14[%c0_52, %c3, %c0_53], %49 {strides = array<i32>} : memref<4x9x128xf32, #tpu.memory_space<vmem>>, vector<4x1x128xf32>,
    %51 = vector.extract_strided_slice %40 {offsets = [0, 4, 0], sizes = [4, 1, 128], strides = [1, 1, 1]} : vector<4x8x128xf32> to vector<4x1x128xf32>
    %c0_54 = arith.constant 0 : index
    %c7 = arith.constant 7 : index
    %c0_55 = arith.constant 0 : index
    %52 = vector.load %arg14[%c0_54, %c7, %c0_55] : memref<4x9x128xf32, #tpu.memory_space<vmem>>, vector<4x1x128xf32>
    tpu.vector_store %arg14[%c0_54, %c7, %c0_55], %51 {strides = array<i32>} : memref<4x9x128xf32, #tpu.memory_space<vmem>>, vector<4x1x128xf32>,
    %53 = vector.extract_strided_slice %40 {offsets = [0, 7, 0], sizes = [4, 1, 128], strides = [1, 1, 1]} : vector<4x8x128xf32> to vector<4x1x128xf32>
    %c0_56 = arith.constant 0 : index
    %c4 = arith.constant 4 : index
    %c0_57 = arith.constant 0 : index
    %54 = vector.load %arg14[%c0_56, %c4, %c0_57] : memref<4x9x128xf32, #tpu.memory_space<vmem>>, vector<4x1x128xf32>
    tpu.vector_store %arg14[%c0_56, %c4, %c0_57], %53 {strides = array<i32>} : memref<4x9x128xf32, #tpu.memory_space<vmem>>, vector<4x1x128xf32>,
    %55 = vector.extract_strided_slice %40 {offsets = [0, 6, 0], sizes = [4, 1, 128], strides = [1, 1, 1]} : vector<4x8x128xf32> to vector<4x1x128xf32>
    %c0_58 = arith.constant 0 : index
    %c8 = arith.constant 8 : index
    %c0_59 = arith.constant 0 : index
    %56 = vector.load %arg14[%c0_58, %c8, %c0_59] : memref<4x9x128xf32, #tpu.memory_space<vmem>>, vector<4x1x128xf32>
    tpu.vector_store %arg14[%c0_58, %c8, %c0_59], %55 {strides = array<i32>} : memref<4x9x128xf32, #tpu.memory_space<vmem>>, vector<4x1x128xf32>,
    %c0_60 = arith.constant 0 : index
    %c0_61 = arith.constant 0 : index
    %c0_62 = arith.constant 0 : index
    %57 = vector.load %arg14[%c0_60, %c0_61, %c0_62] : memref<4x9x128xf32, #tpu.memory_space<vmem>>, vector<4x4x128xf32>
    %58 = vector.shape_cast %57 : vector<4x4x128xf32> to vector<16x128xf32>
    %c0_63 = arith.constant 0 : index
    %c1_64 = arith.constant 1 : index
    %c0_65 = arith.constant 0 : index
    %59 = vector.load %arg14[%c0_63, %c1_64, %c0_65] : memref<4x9x128xf32, #tpu.memory_space<vmem>>, vector<4x4x128xf32>
    %60 = vector.shape_cast %59 : vector<4x4x128xf32> to vector<16x128xf32>
    %c0_66 = arith.constant 0 : index
    %c5_67 = arith.constant 5 : index
    %c0_68 = arith.constant 0 : index
    %61 = vector.load %arg14[%c0_66, %c5_67, %c0_68] : memref<4x9x128xf32, #tpu.memory_space<vmem>>, vector<4x4x128xf32>
    %62 = vector.shape_cast %61 : vector<4x4x128xf32> to vector<16x128xf32>
    %c0_69 = arith.constant 0 : index
    %c0_70 = arith.constant 0 : index
    %c0_71 = arith.constant 0 : index
    %63 = vector.load %arg6[%c0_69, %c0_70, %c0_71] : memref<3x128x40xf32, #tpu.memory_space<vmem>>, vector<1x128x40xf32>
    %64 = vector.shape_cast %63 : vector<1x128x40xf32> to vector<128x40xf32>
    %cst_72 = arith.constant dense<0.000000e+00> : vector<16x40xf32>
    %65 = tpu.matmul %58, %64, %cst_72 {dimension_numbers = #tpu.dot_dimension_numbers<[1], [0], [0], [1], [0, 0, 1, 1], [], []>} : vector<16x128xf32>, vector<128x40xf32>, vector<16x40xf32> -> vector<16x40xf32>
    %c1_73 = arith.constant 1 : index
    %c0_74 = arith.constant 0 : index
    %c0_75 = arith.constant 0 : index
    %66 = vector.load %arg6[%c1_73, %c0_74, %c0_75] : memref<3x128x40xf32, #tpu.memory_space<vmem>>, vector<1x128x40xf32>
    %67 = vector.shape_cast %66 : vector<1x128x40xf32> to vector<128x40xf32>
    %cst_76 = arith.constant dense<0.000000e+00> : vector<16x40xf32>
    %68 = tpu.matmul %62, %67, %cst_76 {dimension_numbers = #tpu.dot_dimension_numbers<[1], [0], [0], [1], [0, 0, 1, 1], [], []>} : vector<16x128xf32>, vector<128x40xf32>, vector<16x40xf32> -> vector<16x40xf32>
    %69 = arith.addf %65, %68 : vector<16x40xf32>
    %c2_77 = arith.constant 2 : index
    %c0_78 = arith.constant 0 : index
    %c0_79 = arith.constant 0 : index
    %70 = vector.load %arg6[%c2_77, %c0_78, %c0_79] : memref<3x128x40xf32, #tpu.memory_space<vmem>>, vector<1x128x40xf32>
    %71 = vector.shape_cast %70 : vector<1x128x40xf32> to vector<128x40xf32>
    %cst_80 = arith.constant dense<0.000000e+00> : vector<16x40xf32>
    %72 = tpu.matmul %60, %71, %cst_80 {dimension_numbers = #tpu.dot_dimension_numbers<[1], [0], [0], [1], [0, 0, 1, 1], [], []>} : vector<16x128xf32>, vector<128x40xf32>, vector<16x40xf32> -> vector<16x40xf32>
    %73 = arith.addf %69, %72 : vector<16x40xf32>
    %c0_81 = arith.constant 0 : index
    %c0_82 = arith.constant 0 : index
    %74 = vector.load %arg7[%c0_81, %c0_82] : memref<1x40xf32, #tpu.memory_space<vmem>>, vector<1x40xf32>
    %75 = vector.broadcast %74 : vector<1x40xf32> to vector<16x40xf32>
    %76 = arith.addf %73, %75 : vector<16x40xf32>
    %cst_83 = arith.constant 0.000000e+00 : f32
    %77 = vector.broadcast %cst_83 : f32 to vector<16x40xf32>
    %78 = arith.maximumf %76, %77 : vector<16x40xf32>
    %79 = vector.shape_cast %78 : vector<16x40xf32> to vector<4x4x40xf32>
    %cst_84 = arith.constant dense<0.000000e+00> : vector<4x40xf32>
    %80 = vector.multi_reduction <add>, %79, %cst_84 [1] : vector<4x4x40xf32> to vector<4x40xf32>
    %c0_85 = arith.constant 0 : index
    %c0_86 = arith.constant 0 : index
    %81 = vector.load %arg8[%c0_85, %c0_86] : memref<40x16xf32, #tpu.memory_space<vmem>>, vector<40x16xf32>
    %cst_87 = arith.constant dense<0.000000e+00> : vector<4x16xf32>
    %82 = tpu.matmul %80, %81, %cst_87 {dimension_numbers = #tpu.dot_dimension_numbers<[1], [0], [0], [1], [0, 0, 1, 1], [], []>} : vector<4x40xf32>, vector<40x16xf32>, vector<4x16xf32> -> vector<4x16xf32>
    %c0_88 = arith.constant 0 : index
    %c0_89 = arith.constant 0 : index
    %83 = vector.load %arg9[%c0_88, %c0_89] : memref<1x16xf32, #tpu.memory_space<vmem>>, vector<1x16xf32>
    %84 = vector.broadcast %83 : vector<1x16xf32> to vector<4x16xf32>
    %85 = arith.addf %82, %84 : vector<4x16xf32>
    %cst_90 = arith.constant 0.000000e+00 : f32
    %86 = vector.broadcast %cst_90 : f32 to vector<4x16xf32>
    %87 = arith.maximumf %85, %86 : vector<4x16xf32>
    %c0_91 = arith.constant 0 : index
    %c0_92 = arith.constant 0 : index
    %88 = vector.load %arg10[%c0_91, %c0_92] : memref<16x128xf32, #tpu.memory_space<vmem>>, vector<16x128xf32>
    %cst_93 = arith.constant dense<0.000000e+00> : vector<4x128xf32>
    %89 = tpu.matmul %87, %88, %cst_93 {dimension_numbers = #tpu.dot_dimension_numbers<[1], [0], [0], [1], [0, 0, 1, 1], [], []>} : vector<4x16xf32>, vector<16x128xf32>, vector<4x128xf32> -> vector<4x128xf32>
    %c0_94 = arith.constant 0 : index
    %c0_95 = arith.constant 0 : index
    %90 = vector.load %arg11[%c0_94, %c0_95] : memref<1x128xf32, #tpu.memory_space<vmem>>, vector<1x128xf32>
    %91 = vector.broadcast %90 : vector<1x128xf32> to vector<4x128xf32>
    %92 = arith.addf %89, %91 : vector<4x128xf32>
    %c0_96 = arith.constant 0 : index
    %c0_97 = arith.constant 0 : index
    %c0_98 = arith.constant 0 : index
    %93 = vector.load %arg12[%c0_96, %c0_97, %c0_98] : memref<1x4x128xf32, #tpu.memory_space<vmem>>, vector<1x4x128xf32>
    %94 = vector.shape_cast %93 : vector<1x4x128xf32> to vector<4x128xf32>
    %95 = vector.shape_cast %92 : vector<4x128xf32> to vector<1x4x128xf32>
    tpu.vector_store %arg12[%c0_96, %c0_97, %c0_98], %95 {strides = array<i32>} : memref<1x4x128xf32, #tpu.memory_space<vmem>>, vector<1x4x128xf32>,
    return
  }
  func.func @transform_0(%arg0: i32) -> (i32, i32, i32) {
    %c0_i32 = arith.constant 0 : i32
    %c0_i32_0 = arith.constant 0 : i32
    %c0_i32_1 = arith.constant 0 : i32
    return %arg0, %c0_i32, %c0_i32_0 : i32, i32, i32
  }
  func.func @transform_1(%arg0: i32) -> (i32, i32) {
    %c0_i32 = arith.constant 0 : i32
    %c0_i32_0 = arith.constant 0 : i32
    %c0_i32_1 = arith.constant 0 : i32
    return %c0_i32, %c0_i32_0 : i32, i32
  }
  func.func @transform_2(%arg0: i32) -> (i32, i32) {
    %c0_i32 = arith.constant 0 : i32
    %c0_i32_0 = arith.constant 0 : i32
    %c0_i32_1 = arith.constant 0 : i32
    return %c0_i32, %c0_i32_0 : i32, i32
  }
  func.func @transform_3(%arg0: i32) -> (i32, i32, i32) {
    %c0_i32 = arith.constant 0 : i32
    %c0_i32_0 = arith.constant 0 : i32
    %c0_i32_1 = arith.constant 0 : i32
    %c0_i32_2 = arith.constant 0 : i32
    return %c0_i32, %c0_i32_0, %c0_i32_1 : i32, i32, i32
  }
  func.func @transform_4(%arg0: i32) -> (i32, i32) {
    %c0_i32 = arith.constant 0 : i32
    %c0_i32_0 = arith.constant 0 : i32
    %c0_i32_1 = arith.constant 0 : i32
    return %c0_i32, %c0_i32_0 : i32, i32
  }
  func.func @transform_5(%arg0: i32) -> (i32, i32, i32) {
    %c0_i32 = arith.constant 0 : i32
    %c0_i32_0 = arith.constant 0 : i32
    %c0_i32_1 = arith.constant 0 : i32
    %c0_i32_2 = arith.constant 0 : i32
    return %c0_i32, %c0_i32_0, %c0_i32_1 : i32, i32, i32
  }
  func.func @transform_6(%arg0: i32) -> (i32, i32) {
    %c0_i32 = arith.constant 0 : i32
    %c0_i32_0 = arith.constant 0 : i32
    %c0_i32_1 = arith.constant 0 : i32
    return %c0_i32, %c0_i32_0 : i32, i32
  }
  func.func @transform_7(%arg0: i32) -> (i32, i32) {
    %c0_i32 = arith.constant 0 : i32
    %c0_i32_0 = arith.constant 0 : i32
    %c0_i32_1 = arith.constant 0 : i32
    return %c0_i32, %c0_i32_0 : i32, i32
  }
  func.func @transform_8(%arg0: i32) -> (i32, i32) {
    %c0_i32 = arith.constant 0 : i32
    %c0_i32_0 = arith.constant 0 : i32
    %c0_i32_1 = arith.constant 0 : i32
    return %c0_i32, %c0_i32_0 : i32, i32
  }
  func.func @transform_9(%arg0: i32) -> (i32, i32) {
    %c0_i32 = arith.constant 0 : i32
    %c0_i32_0 = arith.constant 0 : i32
    %c0_i32_1 = arith.constant 0 : i32
    return %c0_i32, %c0_i32_0 : i32, i32
  }
  func.func @transform_10(%arg0: i32) -> (i32, i32) {
    %c0_i32 = arith.constant 0 : i32
    %c0_i32_0 = arith.constant 0 : i32
    %c0_i32_1 = arith.constant 0 : i32
    return %c0_i32, %c0_i32_0 : i32, i32
  }
  func.func @transform_11(%arg0: i32) -> (i32, i32, i32) {
    %c0_i32 = arith.constant 0 : i32
    %c0_i32_0 = arith.constant 0 : i32
    %c0_i32_1 = arith.constant 0 : i32
    return %arg0, %c0_i32, %c0_i32_0 : i32, i32, i32
  }
}

</mosaic_0001>

<llo_original>
// kernel: tile.23
$region0: #{tile.23}
  #allocation0 [shape = 's32[1]{0}', space=sflag, size = 0x4, scoped, tag = 'scoped memory for tile.23']
  %s0 = inlined_call_operand.vmem [shape: f32[16], index: 0, kind: input, shape index: {}]
  %s1 = inlined_call_operand.vmem [shape: f32[16,16], index: 1, kind: output, shape index: {}]
  // Predicated region
  $region2: #{tile.23} parent=0 // pred_check
    _
  $region3: #{tile.23} parent=0 // pred_check_branch
    %3 = sbr.rel (0) target = $region5
  $region4: #{tile.23} parent=0 // pred_region
    _
  $region5: #{tile.23} parent=0 // pred_fallthru
    _
  %v4 = vld [vmem:[%s0] ss:$0 sm:$0xff]
  %5 = vst [vmem:[%s1] sm:$0xff] %v4
  %s6 = scalar_lea.vmem %s1, 8
  %7 = vst [vmem:[%s6] sm:$0xff] %v4

// kernel: tile.28
$region0: #{tile.28}
  #allocation0 [shape = 's32[1]{0}', space=sflag, size = 0x4, scoped, tag = 'scoped memory for tile.28']
  %s0 = inlined_call_operand.vmem [shape: f32[16], index: 0, kind: input, shape index: {}]
  %s1 = inlined_call_operand.vmem [shape: f32[8,16], index: 1, kind: output, shape index: {}]
  // Predicated region
  $region2: #{tile.28} parent=0 // pred_check
    _
  $region3: #{tile.28} parent=0 // pred_check_branch
    %3 = sbr.rel (0) target = $region5
  $region4: #{tile.28} parent=0 // pred_region
    _
  $region5: #{tile.28} parent=0 // pred_fallthru
    _
  %v4 = vld [vmem:[%s0] ss:$0 sm:$0xff]
  %5 = vst [vmem:[%s1] sm:$0xff] %v4

// kernel: tile.24
$region0: #{tile.24}
  %s0 = inlined_call_operand.vmem [shape: f32[16,16], index: 0, kind: input, shape index: {}]
  %s1 = inlined_call_operand.vmem [shape: f32[1,256], index: 1, kind: output, shape index: {}]
  $region1: #{tile.24} parent=0
    #allocation0 [shape = 'u8[8192]{0}', space=vmem, size = 0x2000, scoped, tag = 'scoped mem for output reshape']
    %s2 = smov 3
    %v3 = vld [vmem:[%s0] ss:$8 sm:%s2]
    %vm4 = vcmask 130048
    %5 = vst.msk [vmem:[#allocation0] ss:$8 sm:$0x3] %vm4, %v3
    %s6 = scalar_lea.vmem %s0, 7
    %s7 = smov 3
    %v8 = vld [vmem:[%s6] ss:$8 sm:%s7]
    %9 = vrot.lane.b32.xlu0 %v8, 112
    %v10 = vpop.permute.xlu0 %9
    %vm11 = vcmask 1048448
    %12 = vst.msk [vmem:[#allocation0] ss:$8 sm:$0x3] %vm11, %v10
    %s13 = scalar_lea.vmem %s0, 6
    %s14 = smov 3
    %v15 = vld [vmem:[%s13] ss:$8 sm:%s14]
    %16 = vrot.lane.b32.xlu0 %v15, 96
    %v17 = vpop.permute.xlu0 %16
    %vm18 = vcmask 917248
    %19 = vst.msk [vmem:[#allocation0] ss:$8 sm:$0x3] %vm18, %v17
    %s20 = scalar_lea.vmem %s0, 5
    %s21 = smov 3
    %v22 = vld [vmem:[%s20] ss:$8 sm:%s21]
    %23 = vrot.lane.b32.xlu0 %v22, 80
    %v24 = vpop.permute.xlu0 %23
    %vm25 = vcmask 786048
    %26 = vst.msk [vmem:[#allocation0] ss:$8 sm:$0x3] %vm25, %v24
    %s27 = scalar_lea.vmem %s0, 4
    %s28 = smov 3
    %v29 = vld [vmem:[%s27] ss:$8 sm:%s28]
    %30 = vrot.lane.b32.xlu0 %v29, 64
    %v31 = vpop.permute.xlu0 %30
    %vm32 = vcmask 654848
    %33 = vst.msk [vmem:[#allocation0] ss:$8 sm:$0x3] %vm32, %v31
    %s34 = scalar_lea.vmem %s0, 3
    %s35 = smov 3
    %v36 = vld [vmem:[%s34] ss:$8 sm:%s35]
    %37 = vrot.lane.b32.xlu0 %v36, 48
    %v38 = vpop.permute.xlu0 %37
    %vm39 = vcmask 523648
    %40 = vst.msk [vmem:[#allocation0] ss:$8 sm:$0x3] %vm39, %v38
    %s41 = scalar_lea.vmem %s0, 2
    %s42 = smov 3
    %v43 = vld [vmem:[%s41] ss:$8 sm:%s42]
    %44 = vrot.lane.b32.xlu0 %v43, 32
    %v45 = vpop.permute.xlu0 %44
    %vm46 = vcmask 392448
    %47 = vst.msk [vmem:[#allocation0] ss:$8 sm:$0x3] %vm46, %v45
    %s48 = scalar_lea.vmem %s0, 1
    %s49 = smov 3
    %v50 = vld [vmem:[%s48] ss:$8 sm:%s49]
    %51 = vrot.lane.b32.xlu0 %v50, 16
    %v52 = vpop.permute.xlu0 %51
    %vm53 = vcmask 261248
    %54 = vst.msk [vmem:[#allocation0] ss:$8 sm:$0x3] %vm53, %v52
    %s56 = ssub.s32 2, 1
    %v57 = vld [vmem:[#allocation0] sm:%s56]
    %s59 = ssub.s32 2, 1
    %60 = vst [vmem:[%s1] sm:%s59] %v57
    %s61 = scalar_lea.vmem [#allocation0], 8
    %v62 = vld [vmem:[%s61] sm:%s56]
    %s64 = ssub.s32 2, 1
    %s65 = scalar_lea.vmem %s1, 1
    %66 = vst [vmem:[%s65] sm:%s64] %v62

// kernel: tile.29
$region0: #{tile.29}
  %s0 = inlined_call_operand.vmem [shape: f32[8,16], index: 0, kind: input, shape index: {}]
  %s1 = inlined_call_operand.vmem [shape: f32[1,128], index: 1, kind: output, shape index: {}]
  $region1: #{tile.29} parent=0
    #allocation0 [shape = 'u8[4096]{0}', space=vmem, size = 0x1000, scoped, tag = 'scoped mem for output reshape']
    %v2 = vld [vmem:[%s0] sm:$0x1]
    %vm3 = vcmask 130048
    %4 = vst.msk [vmem:[#allocation0] sm:$0x1] %vm3, %v2
    %s5 = scalar_lea.vmem %s0, 7
    %v6 = vld [vmem:[%s5] sm:$0x1]
    %7 = vrot.lane.b32.xlu0 %v6, 112
    %v8 = vpop.permute.xlu0 %7
    %vm9 = vcmask 1048448
    %10 = vst.msk [vmem:[#allocation0] sm:$0x1] %vm9, %v8
    %s11 = scalar_lea.vmem %s0, 6
    %v12 = vld [vmem:[%s11] sm:$0x1]
    %13 = vrot.lane.b32.xlu0 %v12, 96
    %v14 = vpop.permute.xlu0 %13
    %vm15 = vcmask 917248
    %16 = vst.msk [vmem:[#allocation0] sm:$0x1] %vm15, %v14
    %s17 = scalar_lea.vmem %s0, 5
    %v18 = vld [vmem:[%s17] sm:$0x1]
    %19 = vrot.lane.b32.xlu0 %v18, 80
    %v20 = vpop.permute.xlu0 %19
    %vm21 = vcmask 786048
    %22 = vst.msk [vmem:[#allocation0] sm:$0x1] %vm21, %v20
    %s23 = scalar_lea.vmem %s0, 4
    %v24 = vld [vmem:[%s23] sm:$0x1]
    %25 = vrot.lane.b32.xlu0 %v24, 64
    %v26 = vpop.permute.xlu0 %25
    %vm27 = vcmask 654848
    %28 = vst.msk [vmem:[#allocation0] sm:$0x1] %vm27, %v26
    %s29 = scalar_lea.vmem %s0, 3
    %v30 = vld [vmem:[%s29] sm:$0x1]
    %31 = vrot.lane.b32.xlu0 %v30, 48
    %v32 = vpop.permute.xlu0 %31
    %vm33 = vcmask 523648
    %34 = vst.msk [vmem:[#allocation0] sm:$0x1] %vm33, %v32
    %s35 = scalar_lea.vmem %s0, 2
    %v36 = vld [vmem:[%s35] sm:$0x1]
    %37 = vrot.lane.b32.xlu0 %v36, 32
    %v38 = vpop.permute.xlu0 %37
    %vm39 = vcmask 392448
    %40 = vst.msk [vmem:[#allocation0] sm:$0x1] %vm39, %v38
    %s41 = scalar_lea.vmem %s0, 1
    %v42 = vld [vmem:[%s41] sm:$0x1]
    %43 = vrot.lane.b32.xlu0 %v42, 16
    %v44 = vpop.permute.xlu0 %43
    %vm45 = vcmask 261248
    %46 = vst.msk [vmem:[#allocation0] sm:$0x1] %vm45, %v44
    %s48 = ssub.s32 2, 1
    %v49 = vld [vmem:[#allocation0] sm:%s48]
    %s51 = ssub.s32 2, 1
    %52 = vst [vmem:[%s1] sm:%s51] %v49

// kernel: tile.33
$region0: #{tile.33}
  #allocation0 [shape = 's32[1]{0}', space=sflag, size = 0x4, scoped, tag = 'scoped memory for tile.33']
  %s0 = inlined_call_operand.vmem [shape: f32[10], index: 0, kind: input, shape index: {}]
  %s1 = inlined_call_operand.vmem [shape: f32[4,10], index: 1, kind: output, shape index: {}]
  // Predicated region
  $region2: #{tile.33} parent=0 // pred_check
    _
  $region3: #{tile.33} parent=0 // pred_check_branch
    %3 = sbr.rel (0) target = $region5
  $region4: #{tile.33} parent=0 // pred_region
    _
  $region5: #{tile.33} parent=0 // pred_fallthru
    _
  %v4 = vld [vmem:[%s0] ss:$0 sm:$0xff]
  %5 = vst [vmem:[%s1] sm:$0xf] %v4

// kernel: tile.34
$region0: #{tile.34}
  %s0 = inlined_call_operand.vmem [shape: f32[4,10], index: 0, kind: input, shape index: {}]
  %s1 = inlined_call_operand.vmem [shape: f32[1,40], index: 1, kind: output, shape index: {}]
  $region1: #{tile.34} parent=0
    #allocation0 [shape = 'u8[4096]{0}', space=vmem, size = 0x1000, scoped, tag = 'scoped mem for output reshape']
    #allocation1 [shape = 'u8[4096]{0}', space=vmem, size = 0x1000, scoped, tag = 'scoped mem for input reshape']
    %s3 = ssub.s32 16, 1
    %v4 = vld [vmem:[%s0] sm:%s3]
    %5 = vst [vmem:[#allocation1] sm:%s3] %v4
    %v6 = vld [vmem:[#allocation1] sm:$0x1]
    %vm7 = vcmask 80896
    %8 = vst.msk [vmem:[#allocation0] sm:$0x1] %vm7, %v6
    %s9 = scalar_lea.vmem [#allocation1], 3
    %v10 = vld [vmem:[%s9] sm:$0x1]
    %11 = vrot.lane.b32.xlu0 %v10, 30
    %v12 = vpop.permute.xlu0 %11
    %vm13 = vcmask 326896
    %14 = vst.msk [vmem:[#allocation0] sm:$0x1] %vm13, %v12
    %s15 = scalar_lea.vmem [#allocation1], 2
    %v16 = vld [vmem:[%s15] sm:$0x1]
    %17 = vrot.lane.b32.xlu0 %v16, 20
    %v18 = vpop.permute.xlu0 %17
    %vm19 = vcmask 244896
    %20 = vst.msk [vmem:[#allocation0] sm:$0x1] %vm19, %v18
    %s21 = scalar_lea.vmem [#allocation1], 1
    %v22 = vld [vmem:[%s21] sm:$0x1]
    %23 = vrot.lane.b32.xlu0 %v22, 10
    %v24 = vpop.permute.xlu0 %23
    %vm25 = vcmask 162896
    %26 = vst.msk [vmem:[#allocation0] sm:$0x1] %vm25, %v24
    %s28 = ssub.s32 2, 1
    %v29 = vld [vmem:[#allocation0] sm:%s28]
    %s31 = ssub.s32 2, 1
    %32 = vst [vmem:[%s1] sm:%s31] %v29

// kernel: convnet_forward.1
$region0: #{convnet_forward.1}
  #allocation0 [shape = 'u32[]', space=smem, size = 0x4, offset = 0x4, fixed_abs, tag = 'smem constant byte address 0x4 - core index']
  #allocation1 [shape = 'u32[72,128]{1,0:T(1,128)}', space=vmem, size = 0x9000, scoped, tag = 'internal scratch']
  #allocation2 [shape = 'f32[4,17,256]{2,1,0:T(8,128)}', space=vmem, size = 0x18000, scoped, tag = 'scratch operand']
  #allocation3 [shape = 'f32[4,9,128]{2,1,0:T(8,128)}', space=vmem, size = 0x8000, scoped, tag = 'scratch operand']
  %s0 = inlined_call_operand.vmem [shape: f32[8,16,288], index: 0, kind: input, shape index: {}]
  %s1 = inlined_call_operand.vmem [shape: f32[288,256], index: 1, kind: input, shape index: {}]
  %s2 = inlined_call_operand.vmem [shape: f32[1,256], index: 2, kind: input, shape index: {}]
  %s3 = inlined_call_operand.vmem [shape: f32[3,256,128], index: 3, kind: input, shape index: {}]
  %s4 = inlined_call_operand.vmem [shape: f32[1,128], index: 4, kind: input, shape index: {}]
  %s5 = inlined_call_operand.vmem [shape: f32[3,128,40], index: 5, kind: input, shape index: {}]
  %s6 = inlined_call_operand.vmem [shape: f32[1,40], index: 6, kind: input, shape index: {}]
  %s7 = inlined_call_operand.vmem [shape: f32[40,16], index: 7, kind: input, shape index: {}]
  %s8 = inlined_call_operand.vmem [shape: f32[1,16], index: 8, kind: input, shape index: {}]
  %s9 = inlined_call_operand.vmem [shape: f32[16,128], index: 9, kind: input, shape index: {}]
  %s10 = inlined_call_operand.vmem [shape: f32[1,128], index: 10, kind: input, shape index: {}]
  %s11 = inlined_call_operand.hbm [shape: f32[2,4,128], index: 11, kind: output, shape index: {}]
  %s12 = sld [smem:[#allocation0]]
  $region77: #{convnet_forward.1} parent=0
    _
  %s14 = ssub.s32 1, %s12
  %s15 = scalar_select 0, %s14, %s12
  $region1: #{convnet_forward.1} parent=0
    #allocation4 [shape = 'u8[4096]{0}', space=vmem, size = 0x1000, scoped, tag = 'output window, operand 0']
    #allocation5 [shape = 's32[2]{0}', space=sflag, size = 0x8, scoped, tag = 'scoped memory for convnet_forward.1']
    %16 = vsyncpa [#allocation5], 0
    %s17 = scalar_lea.sflag [#allocation5], 1
    %18 = vsyncpa %s17, 0
    loop: start=0, step=1, limit=4
    $region2: #{convnet_forward.1} parent=1 // loop_pre_header
      _
    $region3: #{convnet_forward.1} parent=1 // loop_header
      %s20 = sphi 0, %s24
      %p21 = scmp.ge.s32.totalorder %s20, 4
      %s30 = sphi 0, %s32
      %s33 = sphi 0, %s30
      %s34 = sphi 0, %s33
      %s50 = sphi 0, %s34
      %s54 = sphi 0, %s54
      %s56 = sphi 0, %s54
      %s57 = sphi 0, %s56
      %s71 = sphi 0, %s57
      %s75 = sphi 0, %s75
      %s77 = sphi 0, %s75
      %s78 = sphi 0, %s77
      %s92 = sphi 0, %s78
      %s96 = sphi 0, %s96
      %s98 = sphi 0, %s96
      %s99 = sphi 0, %s98
      %s113 = sphi 0, %s99
      %s117 = sphi 0, %s117
      %s119 = sphi 0, %s117
      %s120 = sphi 0, %s119
      %s134 = sphi 0, %s120
      %s138 = sphi 0, %s138
      %s140 = sphi 0, %s138
      %s141 = sphi 0, %s140
      %s155 = sphi 0, %s141
      %s159 = sphi 0, %s159
      %s161 = sphi 0, %s159
      %s162 = sphi 0, %s161
      %s176 = sphi 0, %s162
      %s180 = sphi 0, %s180
      %s182 = sphi 0, %s180
      %s183 = sphi 0, %s182
      %s197 = sphi 0, %s183
      %s201 = sphi 0, %s201
      %s203 = sphi 0, %s201
      %s204 = sphi 0, %s203
      %s218 = sphi 0, %s204
      %s222 = sphi 0, %s222
      %s224 = sphi 0, %s222
      %s225 = sphi 0, %s224
      %s239 = sphi 0, %s225
      %s243 = sphi 0, %s243
      %s245 = sphi 0, %s243
      %s246 = sphi 0, %s245
      %s260 = sphi 0, %s246
      %s266 = sphi 0, %s268
      %s269 = sphi 0, %s266
      %s270 = sphi 0, %s269
      %s286 = sphi 0, %s270
    $region4: #{convnet_forward.1} parent=1 // loop_header_branch
      %23 = sbr.rel (%p21) target = $region8
    $region5: #{convnet_forward.1} parent=1 // loop_body
      %s25 = ssub.s32 %s20, 1
      %s26 = ssub.s32 %s20, 2
      %s27 = sadd.s32 %s20, 1
      %s28 = ssub.s32 %s20, %s27
      %p29 = scmp.eq.s32.totalorder %s28, 0
      %s31 = sadd.s32 %s30, 1
      %s32 = scalar_select %p29, %s30, %s31
      %p35 = pneg %p29
      %p36 = scmp.eq.s32.totalorder %s20, 1
      %p37 = por %p35, %p36
      %p38 = scmp.ne.s32.totalorder %s30, %s33
      %p39 = scmp.eq.s32.totalorder %s20, 0
      %p40 = por %p38, %p39
      %p41 = scmp.ne.s32.totalorder %s30, %s33
      %p42 = scmp.eq.s32.totalorder %s25, 1
      %p43 = por %p41, %p42
      %p44 = scmp.ne.s32.totalorder %s33, %s34
      %p45 = scmp.eq.s32.totalorder %s25, 0
      %p46 = por %p44, %p45
      %p47 = scmp.ne.s32.totalorder %s33, %s34
      %p48 = scmp.eq.s32.totalorder %s26, 1
      %p49 = por %p47, %p48
      %p51 = scmp.ne.s32.totalorder %s34, %s50
      %p52 = scmp.eq.s32.totalorder %s26, 0
      %p53 = por %p51, %p52
      %s55 = sadd.s32 %s54, 1
      %p58 = scmp.eq.s32.totalorder %s20, 1
      %p59 = scmp.ne.s32.totalorder %s54, %s56
      %p60 = scmp.eq.s32.totalorder %s20, 0
      %p61 = por %p59, %p60
      %p62 = scmp.ne.s32.totalorder %s54, %s56
      %p63 = scmp.eq.s32.totalorder %s25, 1
      %p64 = por %p62, %p63
      %p65 = scmp.ne.s32.totalorder %s56, %s57
      %p66 = scmp.eq.s32.totalorder %s25, 0
      %p67 = por %p65, %p66
      %p68 = scmp.ne.s32.totalorder %s56, %s57
      %p69 = scmp.eq.s32.totalorder %s26, 1
      %p70 = por %p68, %p69
      %p72 = scmp.ne.s32.totalorder %s57, %s71
      %p73 = scmp.eq.s32.totalorder %s26, 0
      %p74 = por %p72, %p73
      %s76 = sadd.s32 %s75, 1
      %p79 = scmp.eq.s32.totalorder %s20, 1
      %p80 = scmp.ne.s32.totalorder %s75, %s77
      %p81 = scmp.eq.s32.totalorder %s20, 0
      %p82 = por %p80, %p81
      %p83 = scmp.ne.s32.totalorder %s75, %s77
      %p84 = scmp.eq.s32.totalorder %s25, 1
      %p85 = por %p83, %p84
      %p86 = scmp.ne.s32.totalorder %s77, %s78
      %p87 = scmp.eq.s32.totalorder %s25, 0
      %p88 = por %p86, %p87
      %p89 = scmp.ne.s32.totalorder %s77, %s78
      %p90 = scmp.eq.s32.totalorder %s26, 1
      %p91 = por %p89, %p90
      %p93 = scmp.ne.s32.totalorder %s78, %s92
      %p94 = scmp.eq.s32.totalorder %s26, 0
      %p95 = por %p93, %p94
      %s97 = sadd.s32 %s96, 1
      %p100 = scmp.eq.s32.totalorder %s20, 1
      %p101 = scmp.ne.s32.totalorder %s96, %s98
      %p102 = scmp.eq.s32.totalorder %s20, 0
      %p103 = por %p101, %p102
      %p104 = scmp.ne.s32.totalorder %s96, %s98
      %p105 = scmp.eq.s32.totalorder %s25, 1
      %p106 = por %p104, %p105
      %p107 = scmp.ne.s32.totalorder %s98, %s99
      %p108 = scmp.eq.s32.totalorder %s25, 0
      %p109 = por %p107, %p108
      %p110 = scmp.ne.s32.totalorder %s98, %s99
      %p111 = scmp.eq.s32.totalorder %s26, 1
      %p112 = por %p110, %p111
      %p114 = scmp.ne.s32.totalorder %s99, %s113
      %p115 = scmp.eq.s32.totalorder %s26, 0
      %p116 = por %p114, %p115
      %s118 = sadd.s32 %s117, 1
      %p121 = scmp.eq.s32.totalorder %s20, 1
      %p122 = scmp.ne.s32.totalorder %s117, %s119
      %p123 = scmp.eq.s32.totalorder %s20, 0
      %p124 = por %p122, %p123
      %p125 = scmp.ne.s32.totalorder %s117, %s119
      %p126 = scmp.eq.s32.totalorder %s25, 1
      %p127 = por %p125, %p126
      %p128 = scmp.ne.s32.totalorder %s119, %s120
      %p129 = scmp.eq.s32.totalorder %s25, 0
      %p130 = por %p128, %p129
      %p131 = scmp.ne.s32.totalorder %s119, %s120
      %p132 = scmp.eq.s32.totalorder %s26, 1
      %p133 = por %p131, %p132
      %p135 = scmp.ne.s32.totalorder %s120, %s134
      %p136 = scmp.eq.s32.totalorder %s26, 0
      %p137 = por %p135, %p136
      %s139 = sadd.s32 %s138, 1
      %p142 = scmp.eq.s32.totalorder %s20, 1
      %p143 = scmp.ne.s32.totalorder %s138, %s140
      %p144 = scmp.eq.s32.totalorder %s20, 0
      %p145 = por %p143, %p144
      %p146 = scmp.ne.s32.totalorder %s138, %s140
      %p147 = scmp.eq.s32.totalorder %s25, 1
      %p148 = por %p146, %p147
      %p149 = scmp.ne.s32.totalorder %s140, %s141
      %p150 = scmp.eq.s32.totalorder %s25, 0
      %p151 = por %p149, %p150
      %p152 = scmp.ne.s32.totalorder %s140, %s141
      %p153 = scmp.eq.s32.totalorder %s26, 1
      %p154 = por %p152, %p153
      %p156 = scmp.ne.s32.totalorder %s141, %s155
      %p157 = scmp.eq.s32.totalorder %s26, 0
      %p158 = por %p156, %p157
      %s160 = sadd.s32 %s159, 1
      %p163 = scmp.eq.s32.totalorder %s20, 1
      %p164 = scmp.ne.s32.totalorder %s159, %s161
      %p165 = scmp.eq.s32.totalorder %s20, 0
      %p166 = por %p164, %p165
      %p167 = scmp.ne.s32.totalorder %s159, %s161
      %p168 = scmp.eq.s32.totalorder %s25, 1
      %p169 = por %p167, %p168
      %p170 = scmp.ne.s32.totalorder %s161, %s162
      %p171 = scmp.eq.s32.totalorder %s25, 0
      %p172 = por %p170, %p171
      %p173 = scmp.ne.s32.totalorder %s161, %s162
      %p174 = scmp.eq.s32.totalorder %s26, 1
      %p175 = por %p173, %p174
      %p177 = scmp.ne.s32.totalorder %s162, %s176
      %p178 = scmp.eq.s32.totalorder %s26, 0
      %p179 = por %p177, %p178
      %s181 = sadd.s32 %s180, 1
      %p184 = scmp.eq.s32.totalorder %s20, 1
      %p185 = scmp.ne.s32.totalorder %s180, %s182
      %p186 = scmp.eq.s32.totalorder %s20, 0
      %p187 = por %p185, %p186
      %p188 = scmp.ne.s32.totalorder %s180, %s182
      %p189 = scmp.eq.s32.totalorder %s25, 1
      %p190 = por %p188, %p189
      %p191 = scmp.ne.s32.totalorder %s182, %s183
      %p192 = scmp.eq.s32.totalorder %s25, 0
      %p193 = por %p191, %p192
      %p194 = scmp.ne.s32.totalorder %s182, %s183
      %p195 = scmp.eq.s32.totalorder %s26, 1
      %p196 = por %p194, %p195
      %p198 = scmp.ne.s32.totalorder %s183, %s197
      %p199 = scmp.eq.s32.totalorder %s26, 0
      %p200 = por %p198, %p199
      %s202 = sadd.s32 %s201, 1
      %p205 = scmp.eq.s32.totalorder %s20, 1
      %p206 = scmp.ne.s32.totalorder %s201, %s203
      %p207 = scmp.eq.s32.totalorder %s20, 0
      %p208 = por %p206, %p207
      %p209 = scmp.ne.s32.totalorder %s201, %s203
      %p210 = scmp.eq.s32.totalorder %s25, 1
      %p211 = por %p209, %p210
      %p212 = scmp.ne.s32.totalorder %s203, %s204
      %p213 = scmp.eq.s32.totalorder %s25, 0
      %p214 = por %p212, %p213
      %p215 = scmp.ne.s32.totalorder %s203, %s204
      %p216 = scmp.eq.s32.totalorder %s26, 1
      %p217 = por %p215, %p216
      %p219 = scmp.ne.s32.totalorder %s204, %s218
      %p220 = scmp.eq.s32.totalorder %s26, 0
      %p221 = por %p219, %p220
      %s223 = sadd.s32 %s222, 1
      %p226 = scmp.eq.s32.totalorder %s20, 1
      %p227 = scmp.ne.s32.totalorder %s222, %s224
      %p228 = scmp.eq.s32.totalorder %s20, 0
      %p229 = por %p227, %p228
      %p230 = scmp.ne.s32.totalorder %s222, %s224
      %p231 = scmp.eq.s32.totalorder %s25, 1
      %p232 = por %p230, %p231
      %p233 = scmp.ne.s32.totalorder %s224, %s225
      %p234 = scmp.eq.s32.totalorder %s25, 0
      %p235 = por %p233, %p234
      %p236 = scmp.ne.s32.totalorder %s224, %s225
      %p237 = scmp.eq.s32.totalorder %s26, 1
      %p238 = por %p236, %p237
      %p240 = scmp.ne.s32.totalorder %s225, %s239
      %p241 = scmp.eq.s32.totalorder %s26, 0
      %p242 = por %p240, %p241
      %s244 = sadd.s32 %s243, 1
      %p247 = scmp.eq.s32.totalorder %s20, 1
      %p248 = scmp.ne.s32.totalorder %s243, %s245
      %p249 = scmp.eq.s32.totalorder %s20, 0
      %p250 = por %p248, %p249
      %p251 = scmp.ne.s32.totalorder %s243, %s245
      %p252 = scmp.eq.s32.totalorder %s25, 1
      %p253 = por %p251, %p252
      %p254 = scmp.ne.s32.totalorder %s245, %s246
      %p255 = scmp.eq.s32.totalorder %s25, 0
      %p256 = por %p254, %p255
      %p257 = scmp.ne.s32.totalorder %s245, %s246
      %p258 = scmp.eq.s32.totalorder %s26, 1
      %p259 = por %p257, %p258
      %p261 = scmp.ne.s32.totalorder %s246, %s260
      %p262 = scmp.eq.s32.totalorder %s26, 0
      %p263 = por %p261, %p262
      %s264 = ssub.s32 %s20, %s27
      %p265 = scmp.eq.s32.totalorder %s264, 0
      %s267 = sadd.s32 %s266, 1
      %s268 = scalar_select %p265, %s266, %s267
      %p271 = pneg %p265
      %p272 = scmp.eq.s32.totalorder %s20, 1
      %p273 = por %p271, %p272
      %p274 = scmp.ne.s32.totalorder %s266, %s269
      %p275 = scmp.eq.s32.totalorder %s20, 0
      %p276 = por %p274, %p275
      %p277 = scmp.ne.s32.totalorder %s266, %s269
      %p278 = scmp.eq.s32.totalorder %s25, 1
      %p279 = por %p277, %p278
      %p280 = scmp.ne.s32.totalorder %s269, %s270
      %p281 = scmp.eq.s32.totalorder %s25, 0
      %p282 = por %p280, %p281
      %p283 = scmp.ne.s32.totalorder %s269, %s270
      %p284 = scmp.eq.s32.totalorder %s26, 1
      %p285 = por %p283, %p284
      %p287 = scmp.ne.s32.totalorder %s270, %s286
      %p288 = scmp.eq.s32.totalorder %s26, 0
      %p289 = por %p287, %p288
      %p290 = scmp.le.s32.totalorder 1, %s20
      %p291 = scmp.lt.s32.totalorder %s20, 3
      %p292 = pnand %p290, %p291
      %p293 = pneg %p292
      // Predicated region
      $region9: #{convnet_forward.1} parent=5 // pred_check
        _
      $region10: #{convnet_forward.1} parent=5 // pred_check_branch
        %295 = sbr.rel (%p292) target = $region12
      $region11: #{convnet_forward.1} parent=5 // pred_region
        %s296 = ssub.s32 %s20, 1
        // Predicated region
        $region13: #{convnet_forward.1} parent=11 // pred_check
          %p297 = pneg %p67
        $region14: #{convnet_forward.1} parent=11 // pred_check_branch
          %299 = sbr.rel (%p297) target = $region16
        $region15: #{convnet_forward.1} parent=11 // pred_region
          _
        $region16: #{convnet_forward.1} parent=11 // pred_fallthru
          _
        // Predicated region
        $region17: #{convnet_forward.1} parent=11 // pred_check
          %p300 = pneg %p88
        $region18: #{convnet_forward.1} parent=11 // pred_check_branch
          %302 = sbr.rel (%p300) target = $region20
        $region19: #{convnet_forward.1} parent=11 // pred_region
          _
        $region20: #{convnet_forward.1} parent=11 // pred_fallthru
          _
        // Predicated region
        $region21: #{convnet_forward.1} parent=11 // pred_check
          %p303 = pneg %p109
        $region22: #{convnet_forward.1} parent=11 // pred_check_branch
          %305 = sbr.rel (%p303) target = $region24
        $region23: #{convnet_forward.1} parent=11 // pred_region
          _
        $region24: #{convnet_forward.1} parent=11 // pred_fallthru
          _
        // Predicated region
        $region25: #{convnet_forward.1} parent=11 // pred_check
          %p306 = pneg %p130
        $region26: #{convnet_forward.1} parent=11 // pred_check_branch
          %308 = sbr.rel (%p306) target = $region28
        $region27: #{convnet_forward.1} parent=11 // pred_region
          _
        $region28: #{convnet_forward.1} parent=11 // pred_fallthru
          _
        // Predicated region
        $region29: #{convnet_forward.1} parent=11 // pred_check
          %p309 = pneg %p151
        $region30: #{convnet_forward.1} parent=11 // pred_check_branch
          %311 = sbr.rel (%p309) target = $region32
        $region31: #{convnet_forward.1} parent=11 // pred_region
          _
        $region32: #{convnet_forward.1} parent=11 // pred_fallthru
          _
        // Predicated region
        $region33: #{convnet_forward.1} parent=11 // pred_check
          %p312 = pneg %p172
        $region34: #{convnet_forward.1} parent=11 // pred_check_branch
          %314 = sbr.rel (%p312) target = $region36
        $region35: #{convnet_forward.1} parent=11 // pred_region
          _
        $region36: #{convnet_forward.1} parent=11 // pred_fallthru
          _
        // Predicated region
        $region37: #{convnet_forward.1} parent=11 // pred_check
          %p315 = pneg %p193
        $region38: #{convnet_forward.1} parent=11 // pred_check_branch
          %317 = sbr.rel (%p315) target = $region40
        $region39: #{convnet_forward.1} parent=11 // pred_region
          _
        $region40: #{convnet_forward.1} parent=11 // pred_fallthru
          _
        // Predicated region
        $region41: #{convnet_forward.1} parent=11 // pred_check
          %p318 = pneg %p214
        $region42: #{convnet_forward.1} parent=11 // pred_check_branch
          %320 = sbr.rel (%p318) target = $region44
        $region43: #{convnet_forward.1} parent=11 // pred_region
          _
        $region44: #{convnet_forward.1} parent=11 // pred_fallthru
          _
        // Predicated region
        $region45: #{convnet_forward.1} parent=11 // pred_check
          %p321 = pneg %p235
        $region46: #{convnet_forward.1} parent=11 // pred_check_branch
          %323 = sbr.rel (%p321) target = $region48
        $region47: #{convnet_forward.1} parent=11 // pred_region
          _
        $region48: #{convnet_forward.1} parent=11 // pred_fallthru
          _
        // Predicated region
        $region49: #{convnet_forward.1} parent=11 // pred_check
          %p324 = pneg %p256
        $region50: #{convnet_forward.1} parent=11 // pred_check_branch
          %326 = sbr.rel (%p324) target = $region52
        $region51: #{convnet_forward.1} parent=11 // pred_region
          _
        $region52: #{convnet_forward.1} parent=11 // pred_fallthru
          _
      $region12: #{convnet_forward.1} parent=5 // pred_fallthru
        _
      %p327 = scmp.lt.s32.totalorder %s20, 2
      // Predicated region
      $region53: #{convnet_forward.1} parent=5 // pred_check
        %p328 = pneg %p327
      $region54: #{convnet_forward.1} parent=5 // pred_check_branch
        %330 = sbr.rel (%p328) target = $region56
      $region55: #{convnet_forward.1} parent=5 // pred_region
        // Predicated region
        $region57: #{convnet_forward.1} parent=55 // pred_check
          %p331 = pneg %p40
        $region58: #{convnet_forward.1} parent=55 // pred_check_branch
          %333 = sbr.rel (%p331) target = $region60
        $region59: #{convnet_forward.1} parent=55 // pred_region
          %s334 = smul.u32 4, %s20
          %p335 = scmp.lt.s32.totalorder %s334, 7
          %s336 = scalar_select %p335, %s334, 7
          %s337 = smul.addr %s336, 6
          %s338 = smul.addr %s337, 8
          %s339 = scalar_lea.vmem %s0, %s338
          %s340 = smul.u32 4, %s20
        $region60: #{convnet_forward.1} parent=55 // pred_fallthru
          _
      $region56: #{convnet_forward.1} parent=5 // pred_fallthru
        _
      %p341 = scmp.le.s32.totalorder 1, %s20
      %p342 = scmp.lt.s32.totalorder %s20, 3
      %p343 = pnand %p341, %p342
      %p344 = pneg %p343
      // Predicated region
      $region61: #{convnet_forward.1} parent=5 // pred_check
        _
      $region62: #{convnet_forward.1} parent=5 // pred_check_branch
        %346 = sbr.rel (%p343) target = $region64
      $region63: #{convnet_forward.1} parent=5 // pred_region
        %s347 = ssub.s32 %s20, 1
        %s348 = smul.u32 4, %s25
        %p349 = scmp.lt.s32.totalorder %s348, 7
        %s350 = scalar_select %p349, %s348, 7
        %s351 = smul.addr %s350, 6
        %s352 = smul.addr %s351, 8
        %s353 = scalar_lea.vmem %s0, %s352
        %p354 = pneg %p46
        %p355 = pneg %p43
        %p356 = pneg %p67
        %p357 = pneg %p64
        %p358 = pneg %p88
        %p359 = pneg %p85
        %p360 = pneg %p109
        %p361 = pneg %p106
        %p362 = pneg %p130
        %p363 = pneg %p127
        %p364 = pneg %p151
        %p365 = pneg %p148
        %p366 = pneg %p172
        %p367 = pneg %p169
        %p368 = pneg %p193
        %p369 = pneg %p190
        %p370 = pneg %p214
        %p371 = pneg %p211
        %p372 = pneg %p235
        %p373 = pneg %p232
        %p374 = pneg %p256
        %p375 = pneg %p253
        %p376 = pneg %p282
        %p377 = pneg %p279
        %s378 = sand.u32 %s269, 1
        %s379 = scalar_lea.sflag [#allocation5], %s378
        %s380 = sand.u32 %s269, 1
        %s381 = smul.addr %s380, 4
        %s382 = scalar_lea.vmem [#allocation4], %s381
        %s383 = smul.u32 4, %s25
        %p384 = scmp.lt.s32.totalorder %s383, 7
        %s385 = scalar_select %p384, %s383, 7
        %s386 = smul.addr %s385, 6
        %s387 = smul.addr %s386, 8
        %s388 = scalar_lea.vmem %s0, %s387
        %s389 = smul.u32 4, %s25
        %v390 = vlaneseq
        %vm391 = vcmp.ge.s32.totalorder %v390, 0
        %vm392 = vcmp.lt.s32.totalorder %v390, 256
        %vm393 = vmand %vm391, %vm392
        %394 = vst.msk [vmem:[#allocation2] ss:$8 sm:$0x3] %vm393, 0.0
        %395 = vst.msk [vmem:[#allocation2] ss:$8 sm:$0x0] %vm393, 0.0
        %s396 = scalar_lea.vmem [#allocation2], 48
        %397 = vst.msk [vmem:[%s396] ss:$8 sm:$0x3] %vm393, 0.0
        %398 = vst.msk [vmem:[%s396] ss:$8 sm:$0x0] %vm393, 0.0
        %s399 = scalar_lea.vmem [#allocation2], 96
        %400 = vst.msk [vmem:[%s399] ss:$8 sm:$0x3] %vm393, 0.0
        %401 = vst.msk [vmem:[%s399] ss:$8 sm:$0x0] %vm393, 0.0
        %s402 = scalar_lea.vmem [#allocation2], 144
        %403 = vst.msk [vmem:[%s402] ss:$8 sm:$0x3] %vm393, 0.0
        %404 = vst.msk [vmem:[%s402] ss:$8 sm:$0x0] %vm393, 0.0
        %405 = vst [vmem:[#allocation3] sm:$0x1] 0.0
        %406 = vst [vmem:[#allocation3 + $0x10] sm:$0x1] 0.0
        %407 = vst [vmem:[#allocation3 + $0x20] sm:$0x1] 0.0
        %408 = vst [vmem:[#allocation3 + $0x30] sm:$0x1] 0.0
        %v409 = vld [vmem:[%s388] sm:$0xff]
        %v410 = vld [vmem:[%s388 + $0x8] sm:$0xff]
        %v411 = vld [vmem:[%s388 + $0x10] sm:$0xff]
        %v412 = vld [vmem:[%s388 + $0x18] sm:$0xff]
        %v413 = vld [vmem:[%s388 + $0x20] sm:$0xff]
        %v414 = vld [vmem:[%s388 + $0x28] sm:$0xff]
        %v415 = vld [vmem:[%s388 + $0x30] sm:$0xff]
        %v416 = vld [vmem:[%s388 + $0x38] sm:$0xff]
        %v417 = vld [vmem:[%s388 + $0x40] sm:$0xff]
        %v418 = vld [vmem:[%s388 + $0x48] sm:$0xff]
        %v419 = vld [vmem:[%s388 + $0x50] sm:$0xff]
        %v420 = vld [vmem:[%s388 + $0x58] sm:$0xff]
        %v421 = vld [vmem:[%s388 + $0x60] sm:$0xff]
        %v422 = vld [vmem:[%s388 + $0x68] sm:$0xff]
        %v423 = vld [vmem:[%s388 + $0x70] sm:$0xff]
        %v424 = vld [vmem:[%s388 + $0x78] sm:$0xff]
        %v425 = vld [vmem:[%s388 + $0x80] sm:$0xff]
        %v426 = vld [vmem:[%s388 + $0x88] sm:$0xff]
        %v427 = vld [vmem:[%s388 + $0x90] sm:$0xff]
        %v428 = vld [vmem:[%s388 + $0x98] sm:$0xff]
        %v429 = vld [vmem:[%s388 + $0xa0] sm:$0xff]
        %v430 = vld [vmem:[%s388 + $0xa8] sm:$0xff]
        %v431 = vld [vmem:[%s388 + $0xb0] sm:$0xff]
        %v432 = vld [vmem:[%s388 + $0xb8] sm:$0xff]
        %v433 = vld [vmem:[%s1] sm:$0xff]
        %v434 = vld [vmem:[%s1 + $0x8] sm:$0xff]
        %v435 = vld [vmem:[%s1 + $0x10] sm:$0xff]
        %v436 = vld [vmem:[%s1 + $0x18] sm:$0xff]
        %v437 = vld [vmem:[%s1 + $0x20] sm:$0xff]
        %v438 = vld [vmem:[%s1 + $0x28] sm:$0xff]
        %v439 = vld [vmem:[%s1 + $0x30] sm:$0xff]
        %v440 = vld [vmem:[%s1 + $0x38] sm:$0xff]
        %v441 = vld [vmem:[%s1 + $0x40] sm:$0xff]
        %v442 = vld [vmem:[%s1 + $0x48] sm:$0xff]
        %v443 = vld [vmem:[%s1 + $0x50] sm:$0xff]
        %v444 = vld [vmem:[%s1 + $0x58] sm:$0xff]
        %v445 = vld [vmem:[%s1 + $0x60] sm:$0xff]
        %v446 = vld [vmem:[%s1 + $0x68] sm:$0xff]
        %v447 = vld [vmem:[%s1 + $0x70] sm:$0xff]
        %v448 = vld [vmem:[%s1 + $0x78] sm:$0xff]
        %v449 = vld [vmem:[%s1 + $0x80] sm:$0xff]
        %v450 = vld [vmem:[%s1 + $0x88] sm:$0xff]
        %v451 = vld [vmem:[%s1 + $0x90] sm:$0xff]
        %v452 = vld [vmem:[%s1 + $0x98] sm:$0xff]
        %v453 = vld [vmem:[%s1 + $0xa0] sm:$0xff]
        %v454 = vld [vmem:[%s1 + $0xa8] sm:$0xff]
        %v455 = vld [vmem:[%s1 + $0xb0] sm:$0xff]
        %v456 = vld [vmem:[%s1 + $0xb8] sm:$0xff]
        %v457 = vld [vmem:[%s1 + $0xc0] sm:$0xff]
        %v458 = vld [vmem:[%s1 + $0xc8] sm:$0xff]
        %v459 = vld [vmem:[%s1 + $0xd0] sm:$0xff]
        %v460 = vld [vmem:[%s1 + $0xd8] sm:$0xff]
        %v461 = vld [vmem:[%s1 + $0xe0] sm:$0xff]
        %v462 = vld [vmem:[%s1 + $0xe8] sm:$0xff]
        %v463 = vld [vmem:[%s1 + $0xf0] sm:$0xff]
        %v464 = vld [vmem:[%s1 + $0xf8] sm:$0xff]
        %v465 = vld [vmem:[%s1 + $0x100] sm:$0xff]
        %v466 = vld [vmem:[%s1 + $0x108] sm:$0xff]
        %v467 = vld [vmem:[%s1 + $0x110] sm:$0xff]
        %v468 = vld [vmem:[%s1 + $0x118] sm:$0xff]
        %v469 = vld [vmem:[%s1 + $0x120] sm:$0xff]
        %v470 = vld [vmem:[%s1 + $0x128] sm:$0xff]
        %v471 = vld [vmem:[%s1 + $0x130] sm:$0xff]
        %v472 = vld [vmem:[%s1 + $0x138] sm:$0xff]
        %v473 = vld [vmem:[%s1 + $0x140] sm:$0xff]
        %v474 = vld [vmem:[%s1 + $0x148] sm:$0xff]
        %v475 = vld [vmem:[%s1 + $0x150] sm:$0xff]
        %v476 = vld [vmem:[%s1 + $0x158] sm:$0xff]
        %v477 = vld [vmem:[%s1 + $0x160] sm:$0xff]
        %v478 = vld [vmem:[%s1 + $0x168] sm:$0xff]
        %v479 = vld [vmem:[%s1 + $0x170] sm:$0xff]
        %v480 = vld [vmem:[%s1 + $0x178] sm:$0xff]
        %v481 = vld [vmem:[%s1 + $0x180] sm:$0xff]
        %v482 = vld [vmem:[%s1 + $0x188] sm:$0xff]
        %v483 = vld [vmem:[%s1 + $0x190] sm:$0xff]
        %v484 = vld [vmem:[%s1 + $0x198] sm:$0xff]
        %v485 = vld [vmem:[%s1 + $0x1a0] sm:$0xff]
        %v486 = vld [vmem:[%s1 + $0x1a8] sm:$0xff]
        %v487 = vld [vmem:[%s1 + $0x1b0] sm:$0xff]
        %v488 = vld [vmem:[%s1 + $0x1b8] sm:$0xff]
        %v489 = vld [vmem:[%s1 + $0x1c0] sm:$0xff]
        %v490 = vld [vmem:[%s1 + $0x1c8] sm:$0xff]
        %v491 = vld [vmem:[%s1 + $0x1d0] sm:$0xff]
        %v492 = vld [vmem:[%s1 + $0x1d8] sm:$0xff]
        %v493 = vld [vmem:[%s1 + $0x1e0] sm:$0xff]
        %v494 = vld [vmem:[%s1 + $0x1e8] sm:$0xff]
        %v495 = vld [vmem:[%s1 + $0x1f0] sm:$0xff]
        %v496 = vld [vmem:[%s1 + $0x1f8] sm:$0xff]
        %v497 = vld [vmem:[%s1 + $0x200] sm:$0xff]
        %v498 = vld [vmem:[%s1 + $0x208] sm:$0xff]
        %v499 = vld [vmem:[%s1 + $0x210] sm:$0xff]
        %v500 = vld [vmem:[%s1 + $0x218] sm:$0xff]
        %v501 = vld [vmem:[%s1 + $0x220] sm:$0xff]
        %v502 = vld [vmem:[%s1 + $0x228] sm:$0xff]
        %v503 = vld [vmem:[%s1 + $0x230] sm:$0xff]
        %v504 = vld [vmem:[%s1 + $0x238] sm:$0xff]
        %v505 = vld [vmem:[%s2] sm:$0x3]
        %v507 = vperm.slane %v505, 0
        %v508 = vperm.slane %v505, 1
        %vm511 = vcmask 261120
        %v513 = vsel %vm511, %v411, 0
        %v516 = vsel %vm511, %v414, 0
        %v519 = vsel %vm511, %v417, 0
        %v522 = vsel %vm511, %v420, 0
        %v525 = vsel %vm511, %v423, 0
        %v528 = vsel %vm511, %v426, 0
        %v531 = vsel %vm511, %v429, 0
        %v534 = vsel %vm511, %v432, 0
        %536 = vmatpush.msra.mxu0 %v463
        %537 = vmatpush.msra.mxu0 %v461
        %538 = vmatpush.msra.mxu0 %v459
        %539 = vmatpush.msra.mxu0 %v457
        %540 = vmatpush.msra.mxu0 %v455
        %541 = vmatpush.msra.mxu0 %v453
        %542 = vmatpush.msra.mxu0 %v451
        %543 = vmatpush.msra.mxu0 %v449
        %544 = vmatpush.msra.mxu0 %v447
        %545 = vmatpush.msra.mxu0 %v445
        %546 = vmatpush.msra.mxu0 %v443
        %547 = vmatpush.msra.mxu0 %v441
        %548 = vmatpush.msra.mxu0 %v439
        %549 = vmatpush.msra.mxu0 %v437
        %550 = vmatpush.msra.mxu0 %v435
        %551 = vmatpush.msra.mxu0 %v433
        %552 = vmatmul.f32.gmra.mxu0 %v409
        %v553 = vpop.f32.mrf.mxu0
        %v554 = vadd.f32 %v507, %v553
        %555 = vmatmul.f32.gmra.mxu0 %v412
        %v556 = vpop.f32.mrf.mxu0
        %v557 = vadd.f32 %v507, %v556
        %558 = vmatmul.f32.gmra.mxu0 %v415
        %v559 = vpop.f32.mrf.mxu0
        %v560 = vadd.f32 %v507, %v559
        %561 = vmatmul.f32.gmra.mxu0 %v418
        %v562 = vpop.f32.mrf.mxu0
        %v563 = vadd.f32 %v507, %v562
        %564 = vmatmul.f32.gmra.mxu0 %v421
        %v565 = vpop.f32.mrf.mxu0
        %v566 = vadd.f32 %v507, %v565
        %567 = vmatmul.f32.gmra.mxu0 %v424
        %v568 = vpop.f32.mrf.mxu0
        %v569 = vadd.f32 %v507, %v568
        %570 = vmatmul.f32.gmra.mxu0 %v427
        %v571 = vpop.f32.mrf.mxu0
        %v572 = vadd.f32 %v507, %v571
        %573 = vmatmul.f32.gmra.mxu0 %v430
        %v574 = vpop.f32.mrf.mxu0
        %v575 = vadd.f32 %v507, %v574
        %576 = vdwg.mxu0
        %577 = vmatpush.msra.mxu0 %v495
        %578 = vmatpush.msra.mxu0 %v493
        %579 = vmatpush.msra.mxu0 %v491
        %580 = vmatpush.msra.mxu0 %v489
        %581 = vmatpush.msra.mxu0 %v487
        %582 = vmatpush.msra.mxu0 %v485
        %583 = vmatpush.msra.mxu0 %v483
        %584 = vmatpush.msra.mxu0 %v481
        %585 = vmatpush.msra.mxu0 %v479
        %586 = vmatpush.msra.mxu0 %v477
        %587 = vmatpush.msra.mxu0 %v475
        %588 = vmatpush.msra.mxu0 %v473
        %589 = vmatpush.msra.mxu0 %v471
        %590 = vmatpush.msra.mxu0 %v469
        %591 = vmatpush.msra.mxu0 %v467
        %592 = vmatpush.msra.mxu0 %v465
        %593 = vmatmul.f32.gmra.mxu0 %v410
        %v594 = vpop.f32.mrf.mxu0
        %v595 = vadd.f32 %v554, %v594
        %596 = vmatmul.f32.gmra.mxu0 %v413
        %v597 = vpop.f32.mrf.mxu0
        %v598 = vadd.f32 %v557, %v597
        %599 = vmatmul.f32.gmra.mxu0 %v416
        %v600 = vpop.f32.mrf.mxu0
        %v601 = vadd.f32 %v560, %v600
        %602 = vmatmul.f32.gmra.mxu0 %v419
        %v603 = vpop.f32.mrf.mxu0
        %v604 = vadd.f32 %v563, %v603
        %605 = vmatmul.f32.gmra.mxu0 %v422
        %v606 = vpop.f32.mrf.mxu0
        %v607 = vadd.f32 %v566, %v606
        %608 = vmatmul.f32.gmra.mxu0 %v425
        %v609 = vpop.f32.mrf.mxu0
        %v610 = vadd.f32 %v569, %v609
        %611 = vmatmul.f32.gmra.mxu0 %v428
        %v612 = vpop.f32.mrf.mxu0
        %v613 = vadd.f32 %v572, %v612
        %614 = vmatmul.f32.gmra.mxu0 %v431
        %v615 = vpop.f32.mrf.mxu0
        %v616 = vadd.f32 %v575, %v615
        %617 = vdwg.mxu0
        %618 = vmatpush.msra.mxu0 0.0
        %619 = vmatpush.msra.mxu0 0.0
        %620 = vmatpush.msra.mxu0 0.0
        %621 = vmatpush.msra.mxu0 0.0
        %622 = vmatpush.msra.mxu0 0.0
        %623 = vmatpush.msra.mxu0 0.0
        %624 = vmatpush.msra.mxu0 0.0
        %625 = vmatpush.msra.mxu0 0.0
        %626 = vmatpush.msra.mxu0 0.0
        %627 = vmatpush.msra.mxu0 0.0
        %628 = vmatpush.msra.mxu0 0.0
        %629 = vmatpush.msra.mxu0 0.0
        %630 = vmatpush.msra.mxu0 %v503
        %631 = vmatpush.msra.mxu0 %v501
        %632 = vmatpush.msra.mxu0 %v499
        %633 = vmatpush.msra.mxu0 %v497
        %634 = vmatmul.f32.gmra.mxu0 %v513
        %v635 = vpop.f32.mrf.mxu0
        %v636 = vadd.f32 %v595, %v635
        %637 = vmatmul.f32.gmra.mxu0 %v516
        %v638 = vpop.f32.mrf.mxu0
        %v639 = vadd.f32 %v598, %v638
        %640 = vmatmul.f32.gmra.mxu0 %v519
        %v641 = vpop.f32.mrf.mxu0
        %v642 = vadd.f32 %v601, %v641
        %643 = vmatmul.f32.gmra.mxu0 %v522
        %v644 = vpop.f32.mrf.mxu0
        %v645 = vadd.f32 %v604, %v644
        %646 = vmatmul.f32.gmra.mxu0 %v525
        %v647 = vpop.f32.mrf.mxu0
        %v648 = vadd.f32 %v607, %v647
        %649 = vmatmul.f32.gmra.mxu0 %v528
        %v650 = vpop.f32.mrf.mxu0
        %v651 = vadd.f32 %v610, %v650
        %652 = vmatmul.f32.gmra.mxu0 %v531
        %v653 = vpop.f32.mrf.mxu0
        %v654 = vadd.f32 %v613, %v653
        %655 = vmatmul.f32.gmra.mxu0 %v534
        %v656 = vpop.f32.mrf.mxu0
        %v657 = vadd.f32 %v616, %v656
        %658 = vdwg.mxu0
        %659 = vmatpush.msra.mxu0 %v464
        %660 = vmatpush.msra.mxu0 %v462
        %661 = vmatpush.msra.mxu0 %v460
        %662 = vmatpush.msra.mxu0 %v458
        %663 = vmatpush.msra.mxu0 %v456
        %664 = vmatpush.msra.mxu0 %v454
        %665 = vmatpush.msra.mxu0 %v452
        %666 = vmatpush.msra.mxu0 %v450
        %667 = vmatpush.msra.mxu0 %v448
        %668 = vmatpush.msra.mxu0 %v446
        %669 = vmatpush.msra.mxu0 %v444
        %670 = vmatpush.msra.mxu0 %v442
        %671 = vmatpush.msra.mxu0 %v440
        %672 = vmatpush.msra.mxu0 %v438
        %673 = vmatpush.msra.mxu0 %v436
        %674 = vmatpush.msra.mxu0 %v434
        %675 = vmatmul.f32.gmra.mxu0 %v409
        %v676 = vpop.f32.mrf.mxu0
        %v677 = vadd.f32 %v508, %v676
        %678 = vmatmul.f32.gmra.mxu0 %v412
        %v679 = vpop.f32.mrf.mxu0
        %v680 = vadd.f32 %v508, %v679
        %681 = vmatmul.f32.gmra.mxu0 %v415
        %v682 = vpop.f32.mrf.mxu0
        %v683 = vadd.f32 %v508, %v682
        %684 = vmatmul.f32.gmra.mxu0 %v418
        %v685 = vpop.f32.mrf.mxu0
        %v686 = vadd.f32 %v508, %v685
        %687 = vmatmul.f32.gmra.mxu0 %v421
        %v688 = vpop.f32.mrf.mxu0
        %v689 = vadd.f32 %v508, %v688
        %690 = vmatmul.f32.gmra.mxu0 %v424
        %v691 = vpop.f32.mrf.mxu0
        %v692 = vadd.f32 %v508, %v691
        %693 = vmatmul.f32.gmra.mxu0 %v427
        %v694 = vpop.f32.mrf.mxu0
        %v695 = vadd.f32 %v508, %v694
        %696 = vmatmul.f32.gmra.mxu0 %v430
        %v697 = vpop.f32.mrf.mxu0
        %v698 = vadd.f32 %v508, %v697
        %699 = vdwg.mxu0
        %700 = vmatpush.msra.mxu0 %v496
        %701 = vmatpush.msra.mxu0 %v494
        %702 = vmatpush.msra.mxu0 %v492
        %703 = vmatpush.msra.mxu0 %v490
        %704 = vmatpush.msra.mxu0 %v488
        %705 = vmatpush.msra.mxu0 %v486
        %706 = vmatpush.msra.mxu0 %v484
        %707 = vmatpush.msra.mxu0 %v482
        %708 = vmatpush.msra.mxu0 %v480
        %709 = vmatpush.msra.mxu0 %v478
        %710 = vmatpush.msra.mxu0 %v476
        %711 = vmatpush.msra.mxu0 %v474
        %712 = vmatpush.msra.mxu0 %v472
        %713 = vmatpush.msra.mxu0 %v470
        %714 = vmatpush.msra.mxu0 %v468
        %715 = vmatpush.msra.mxu0 %v466
        %716 = vmatmul.f32.gmra.mxu0 %v410
        %v717 = vpop.f32.mrf.mxu0
        %v718 = vadd.f32 %v677, %v717
        %719 = vmatmul.f32.gmra.mxu0 %v413
        %v720 = vpop.f32.mrf.mxu0
        %v721 = vadd.f32 %v680, %v720
        %722 = vmatmul.f32.gmra.mxu0 %v416
        %v723 = vpop.f32.mrf.mxu0
        %v724 = vadd.f32 %v683, %v723
        %725 = vmatmul.f32.gmra.mxu0 %v419
        %v726 = vpop.f32.mrf.mxu0
        %v727 = vadd.f32 %v686, %v726
        %728 = vmatmul.f32.gmra.mxu0 %v422
        %v729 = vpop.f32.mrf.mxu0
        %v730 = vadd.f32 %v689, %v729
        %731 = vmatmul.f32.gmra.mxu0 %v425
        %v732 = vpop.f32.mrf.mxu0
        %v733 = vadd.f32 %v692, %v732
        %734 = vmatmul.f32.gmra.mxu0 %v428
        %v735 = vpop.f32.mrf.mxu0
        %v736 = vadd.f32 %v695, %v735
        %737 = vmatmul.f32.gmra.mxu0 %v431
        %v738 = vpop.f32.mrf.mxu0
        %v739 = vadd.f32 %v698, %v738
        %740 = vdwg.mxu0
        %741 = vmatpush.msra.mxu0 0.0
        %742 = vmatpush.msra.mxu0 0.0
        %743 = vmatpush.msra.mxu0 0.0
        %744 = vmatpush.msra.mxu0 0.0
        %745 = vmatpush.msra.mxu0 0.0
        %746 = vmatpush.msra.mxu0 0.0
        %747 = vmatpush.msra.mxu0 0.0
        %748 = vmatpush.msra.mxu0 0.0
        %749 = vmatpush.msra.mxu0 0.0
        %750 = vmatpush.msra.mxu0 0.0
        %751 = vmatpush.msra.mxu0 0.0
        %752 = vmatpush.msra.mxu0 0.0
        %753 = vmatpush.msra.mxu0 %v504
        %754 = vmatpush.msra.mxu0 %v502
        %755 = vmatpush.msra.mxu0 %v500
        %756 = vmatpush.msra.mxu0 %v498
        %757 = vmatmul.f32.gmra.mxu0 %v513
        %v758 = vpop.f32.mrf.mxu0
        %v759 = vadd.f32 %v718, %v758
        %760 = vmatmul.f32.gmra.mxu0 %v516
        %v761 = vpop.f32.mrf.mxu0
        %v762 = vadd.f32 %v721, %v761
        %763 = vmatmul.f32.gmra.mxu0 %v519
        %v764 = vpop.f32.mrf.mxu0
        %v765 = vadd.f32 %v724, %v764
        %766 = vmatmul.f32.gmra.mxu0 %v522
        %v767 = vpop.f32.mrf.mxu0
        %v768 = vadd.f32 %v727, %v767
        %769 = vmatmul.f32.gmra.mxu0 %v525
        %v770 = vpop.f32.mrf.mxu0
        %v771 = vadd.f32 %v730, %v770
        %772 = vmatmul.f32.gmra.mxu0 %v528
        %v773 = vpop.f32.mrf.mxu0
        %v774 = vadd.f32 %v733, %v773
        %775 = vmatmul.f32.gmra.mxu0 %v531
        %v776 = vpop.f32.mrf.mxu0
        %v777 = vadd.f32 %v736, %v776
        %778 = vmatmul.f32.gmra.mxu0 %v534
        %v779 = vpop.f32.mrf.mxu0
        %v780 = vadd.f32 %v739, %v779
        %781 = vdwg.mxu0
        %v782 = vmax.f32 %v636, 0.0
        %v783 = vmax.f32 %v759, 0.0
        %v784 = vmax.f32 %v639, 0.0
        %v785 = vmax.f32 %v762, 0.0
        %v786 = vmax.f32 %v642, 0.0
        %v787 = vmax.f32 %v765, 0.0
        %v788 = vmax.f32 %v645, 0.0
        %v789 = vmax.f32 %v768, 0.0
        %v790 = vmax.f32 %v648, 0.0
        %v791 = vmax.f32 %v771, 0.0
        %v792 = vmax.f32 %v651, 0.0
        %v793 = vmax.f32 %v774, 0.0
        %v794 = vmax.f32 %v654, 0.0
        %v795 = vmax.f32 %v777, 0.0
        %v796 = vmax.f32 %v657, 0.0
        %v797 = vmax.f32 %v780, 0.0
        %v806 = vrot.slane %v782, 7
        %v807 = vrot.slane %v783, 7
        %v808 = vrot.slane %v786, 7
        %v809 = vrot.slane %v787, 7
        %v810 = vrot.slane %v790, 7
        %v811 = vrot.slane %v791, 7
        %v812 = vrot.slane %v794, 7
        %v813 = vrot.slane %v795, 7
        %822 = vst [vmem:[#allocation2 + $0x10] sm:$0xfe] %v806
        %823 = vst [vmem:[#allocation2 + $0x18] sm:$0xfe] %v807
        %824 = vst [vmem:[#allocation2 + $0x20] sm:$0x1] %v806
        %825 = vst [vmem:[#allocation2 + $0x28] sm:$0x1] %v807
        %826 = vst [vmem:[#allocation2 + $0x40] sm:$0xfe] %v808
        %827 = vst [vmem:[#allocation2 + $0x48] sm:$0xfe] %v809
        %828 = vst [vmem:[#allocation2 + $0x50] sm:$0x1] %v808
        %829 = vst [vmem:[#allocation2 + $0x58] sm:$0x1] %v809
        %830 = vst [vmem:[#allocation2 + $0x70] sm:$0xfe] %v810
        %831 = vst [vmem:[#allocation2 + $0x78] sm:$0xfe] %v811
        %832 = vst [vmem:[#allocation2 + $0x80] sm:$0x1] %v810
        %833 = vst [vmem:[#allocation2 + $0x88] sm:$0x1] %v811
        %834 = vst [vmem:[#allocation2 + $0xa0] sm:$0xfe] %v812
        %835 = vst [vmem:[#allocation2 + $0xa8] sm:$0xfe] %v813
        %836 = vst [vmem:[#allocation2 + $0xb0] sm:$0x1] %v812
        %837 = vst [vmem:[#allocation2 + $0xb8] sm:$0x1] %v813
        %v846 = vrot.slane %v784, 7
        %v847 = vrot.slane %v785, 7
        %v848 = vrot.slane %v788, 7
        %v849 = vrot.slane %v789, 7
        %v850 = vrot.slane %v792, 7
        %v851 = vrot.slane %v793, 7
        %v852 = vrot.slane %v796, 7
        %v853 = vrot.slane %v797, 7
        %862 = vst [vmem:[#allocation2] sm:$0xfe] %v846
        %863 = vst [vmem:[#allocation2 + $0x8] sm:$0xfe] %v847
        %864 = vst [vmem:[#allocation2 + $0x10] sm:$0x1] %v846
        %865 = vst [vmem:[#allocation2 + $0x18] sm:$0x1] %v847
        %866 = vst [vmem:[#allocation2 + $0x30] sm:$0xfe] %v848
        %867 = vst [vmem:[#allocation2 + $0x38] sm:$0xfe] %v849
        %868 = vst [vmem:[#allocation2 + $0x40] sm:$0x1] %v848
        %869 = vst [vmem:[#allocation2 + $0x48] sm:$0x1] %v849
        %870 = vst [vmem:[#allocation2 + $0x60] sm:$0xfe] %v850
        %871 = vst [vmem:[#allocation2 + $0x68] sm:$0xfe] %v851
        %872 = vst [vmem:[#allocation2 + $0x70] sm:$0x1] %v850
        %873 = vst [vmem:[#allocation2 + $0x78] sm:$0x1] %v851
        %874 = vst [vmem:[#allocation2 + $0x90] sm:$0xfe] %v852
        %875 = vst [vmem:[#allocation2 + $0x98] sm:$0xfe] %v853
        %876 = vst [vmem:[#allocation2 + $0xa0] sm:$0x1] %v852
        %877 = vst [vmem:[#allocation2 + $0xa8] sm:$0x1] %v853
        %v878 = vld [vmem:[#allocation2] sm:$0xff]
        %v879 = vld [vmem:[#allocation2 + $0x8] sm:$0xff]
        %v880 = vld [vmem:[#allocation2 + $0x30] sm:$0xff]
        %v881 = vld [vmem:[#allocation2 + $0x38] sm:$0xff]
        %v882 = vld [vmem:[#allocation2 + $0x60] sm:$0xff]
        %v883 = vld [vmem:[#allocation2 + $0x68] sm:$0xff]
        %v884 = vld [vmem:[#allocation2 + $0x90] sm:$0xff]
        %v885 = vld [vmem:[#allocation2 + $0x98] sm:$0xff]
        %v886 = vld [vmem:[#allocation2] sm:$0xfe]
        %v887 = vld [vmem:[#allocation2 + $0x8] sm:$0xfe]
        %v888 = vld [vmem:[#allocation2 + $0x10] sm:$0x1]
        %v889 = vld [vmem:[#allocation2 + $0x18] sm:$0x1]
        %v890 = vld [vmem:[#allocation2 + $0x30] sm:$0xfe]
        %v891 = vld [vmem:[#allocation2 + $0x38] sm:$0xfe]
        %v892 = vld [vmem:[#allocation2 + $0x40] sm:$0x1]
        %v893 = vld [vmem:[#allocation2 + $0x48] sm:$0x1]
        %v894 = vld [vmem:[#allocation2 + $0x60] sm:$0xfe]
        %v895 = vld [vmem:[#allocation2 + $0x68] sm:$0xfe]
        %v896 = vld [vmem:[#allocation2 + $0x70] sm:$0x1]
        %v897 = vld [vmem:[#allocation2 + $0x78] sm:$0x1]
        %v898 = vld [vmem:[#allocation2 + $0x90] sm:$0xfe]
        %v899 = vld [vmem:[#allocation2 + $0x98] sm:$0xfe]
        %v900 = vld [vmem:[#allocation2 + $0xa0] sm:$0x1]
        %v901 = vld [vmem:[#allocation2 + $0xa8] sm:$0x1]
        %vm918 = vcmask 1046528
        %v919 = vrot.slane %v886, 1
        %v920 = vrot.slane %v888, 1
        %v921 = vsel %vm918, %v919, %v920
        %v922 = vrot.slane %v887, 1
        %v923 = vrot.slane %v889, 1
        %v924 = vsel %vm918, %v922, %v923
        %v925 = vrot.slane %v890, 1
        %v926 = vrot.slane %v892, 1
        %v927 = vsel %vm918, %v925, %v926
        %v928 = vrot.slane %v891, 1
        %v929 = vrot.slane %v893, 1
        %v930 = vsel %vm918, %v928, %v929
        %v931 = vrot.slane %v894, 1
        %v932 = vrot.slane %v896, 1
        %v933 = vsel %vm918, %v931, %v932
        %v934 = vrot.slane %v895, 1
        %v935 = vrot.slane %v897, 1
        %v936 = vsel %vm918, %v934, %v935
        %v937 = vrot.slane %v898, 1
        %v938 = vrot.slane %v900, 1
        %v939 = vsel %vm918, %v937, %v938
        %v940 = vrot.slane %v899, 1
        %v941 = vrot.slane %v901, 1
        %v942 = vsel %vm918, %v940, %v941
        %v951 = vld [vmem:[#allocation2 + $0x10] sm:$0xfe]
        %v952 = vld [vmem:[#allocation2 + $0x18] sm:$0xfe]
        %v953 = vld [vmem:[#allocation2 + $0x20] sm:$0x1]
        %v954 = vld [vmem:[#allocation2 + $0x28] sm:$0x1]
        %v955 = vld [vmem:[#allocation2 + $0x40] sm:$0xfe]
        %v956 = vld [vmem:[#allocation2 + $0x48] sm:$0xfe]
        %v957 = vld [vmem:[#allocation2 + $0x50] sm:$0x1]
        %v958 = vld [vmem:[#allocation2 + $0x58] sm:$0x1]
        %v959 = vld [vmem:[#allocation2 + $0x70] sm:$0xfe]
        %v960 = vld [vmem:[#allocation2 + $0x78] sm:$0xfe]
        %v961 = vld [vmem:[#allocation2 + $0x80] sm:$0x1]
        %v962 = vld [vmem:[#allocation2 + $0x88] sm:$0x1]
        %v963 = vld [vmem:[#allocation2 + $0xa0] sm:$0xfe]
        %v964 = vld [vmem:[#allocation2 + $0xa8] sm:$0xfe]
        %v965 = vld [vmem:[#allocation2 + $0xb0] sm:$0x1]
        %v966 = vld [vmem:[#allocation2 + $0xb8] sm:$0x1]
        %v983 = vrot.slane %v951, 1
        %v984 = vrot.slane %v953, 1
        %v985 = vsel %vm918, %v983, %v984
        %v986 = vrot.slane %v952, 1
        %v987 = vrot.slane %v954, 1
        %v988 = vsel %vm918, %v986, %v987
        %v989 = vrot.slane %v955, 1
        %v990 = vrot.slane %v957, 1
        %v991 = vsel %vm918, %v989, %v990
        %v992 = vrot.slane %v956, 1
        %v993 = vrot.slane %v958, 1
        %v994 = vsel %vm918, %v992, %v993
        %v995 = vrot.slane %v959, 1
        %v996 = vrot.slane %v961, 1
        %v997 = vsel %vm918, %v995, %v996
        %v998 = vrot.slane %v960, 1
        %v999 = vrot.slane %v962, 1
        %v1000 = vsel %vm918, %v998, %v999
        %v1001 = vrot.slane %v963, 1
        %v1002 = vrot.slane %v965, 1
        %v1003 = vsel %vm918, %v1001, %v1002
        %v1004 = vrot.slane %v964, 1
        %v1005 = vrot.slane %v966, 1
        %v1006 = vsel %vm918, %v1004, %v1005
        %v1015 = vld [vmem:[%s3] sm:$0xff]
        %v1016 = vld [vmem:[%s3 + $0x8] sm:$0xff]
        %v1017 = vld [vmem:[%s3 + $0x10] sm:$0xff]
        %v1018 = vld [vmem:[%s3 + $0x18] sm:$0xff]
        %v1019 = vld [vmem:[%s3 + $0x20] sm:$0xff]
        %v1020 = vld [vmem:[%s3 + $0x28] sm:$0xff]
        %v1021 = vld [vmem:[%s3 + $0x30] sm:$0xff]
        %v1022 = vld [vmem:[%s3 + $0x38] sm:$0xff]
        %v1023 = vld [vmem:[%s3 + $0x40] sm:$0xff]
        %v1024 = vld [vmem:[%s3 + $0x48] sm:$0xff]
        %v1025 = vld [vmem:[%s3 + $0x50] sm:$0xff]
        %v1026 = vld [vmem:[%s3 + $0x58] sm:$0xff]
        %v1027 = vld [vmem:[%s3 + $0x60] sm:$0xff]
        %v1028 = vld [vmem:[%s3 + $0x68] sm:$0xff]
        %v1029 = vld [vmem:[%s3 + $0x70] sm:$0xff]
        %v1030 = vld [vmem:[%s3 + $0x78] sm:$0xff]
        %v1031 = vld [vmem:[%s3 + $0x80] sm:$0xff]
        %v1032 = vld [vmem:[%s3 + $0x88] sm:$0xff]
        %v1033 = vld [vmem:[%s3 + $0x90] sm:$0xff]
        %v1034 = vld [vmem:[%s3 + $0x98] sm:$0xff]
        %v1035 = vld [vmem:[%s3 + $0xa0] sm:$0xff]
        %v1036 = vld [vmem:[%s3 + $0xa8] sm:$0xff]
        %v1037 = vld [vmem:[%s3 + $0xb0] sm:$0xff]
        %v1038 = vld [vmem:[%s3 + $0xb8] sm:$0xff]
        %v1039 = vld [vmem:[%s3 + $0xc0] sm:$0xff]
        %v1040 = vld [vmem:[%s3 + $0xc8] sm:$0xff]
        %v1041 = vld [vmem:[%s3 + $0xd0] sm:$0xff]
        %v1042 = vld [vmem:[%s3 + $0xd8] sm:$0xff]
        %v1043 = vld [vmem:[%s3 + $0xe0] sm:$0xff]
        %v1044 = vld [vmem:[%s3 + $0xe8] sm:$0xff]
        %v1045 = vld [vmem:[%s3 + $0xf0] sm:$0xff]
        %v1046 = vld [vmem:[%s3 + $0xf8] sm:$0xff]
        %s1047 = scalar_lea.vmem %s3, 256
        %v1048 = vld [vmem:[%s1047] sm:$0xff]
        %v1049 = vld [vmem:[%s1047 + $0x8] sm:$0xff]
        %v1050 = vld [vmem:[%s1047 + $0x10] sm:$0xff]
        %v1051 = vld [vmem:[%s1047 + $0x18] sm:$0xff]
        %v1052 = vld [vmem:[%s1047 + $0x20] sm:$0xff]
        %v1053 = vld [vmem:[%s1047 + $0x28] sm:$0xff]
        %v1054 = vld [vmem:[%s1047 + $0x30] sm:$0xff]
        %v1055 = vld [vmem:[%s1047 + $0x38] sm:$0xff]
        %v1056 = vld [vmem:[%s1047 + $0x40] sm:$0xff]
        %v1057 = vld [vmem:[%s1047 + $0x48] sm:$0xff]
        %v1058 = vld [vmem:[%s1047 + $0x50] sm:$0xff]
        %v1059 = vld [vmem:[%s1047 + $0x58] sm:$0xff]
        %v1060 = vld [vmem:[%s1047 + $0x60] sm:$0xff]
        %v1061 = vld [vmem:[%s1047 + $0x68] sm:$0xff]
        %v1062 = vld [vmem:[%s1047 + $0x70] sm:$0xff]
        %v1063 = vld [vmem:[%s1047 + $0x78] sm:$0xff]
        %v1064 = vld [vmem:[%s1047 + $0x80] sm:$0xff]
        %v1065 = vld [vmem:[%s1047 + $0x88] sm:$0xff]
        %v1066 = vld [vmem:[%s1047 + $0x90] sm:$0xff]
        %v1067 = vld [vmem:[%s1047 + $0x98] sm:$0xff]
        %v1068 = vld [vmem:[%s1047 + $0xa0] sm:$0xff]
        %v1069 = vld [vmem:[%s1047 + $0xa8] sm:$0xff]
        %v1070 = vld [vmem:[%s1047 + $0xb0] sm:$0xff]
        %v1071 = vld [vmem:[%s1047 + $0xb8] sm:$0xff]
        %v1072 = vld [vmem:[%s1047 + $0xc0] sm:$0xff]
        %v1073 = vld [vmem:[%s1047 + $0xc8] sm:$0xff]
        %v1074 = vld [vmem:[%s1047 + $0xd0] sm:$0xff]
        %v1075 = vld [vmem:[%s1047 + $0xd8] sm:$0xff]
        %v1076 = vld [vmem:[%s1047 + $0xe0] sm:$0xff]
        %v1077 = vld [vmem:[%s1047 + $0xe8] sm:$0xff]
        %v1078 = vld [vmem:[%s1047 + $0xf0] sm:$0xff]
        %v1079 = vld [vmem:[%s1047 + $0xf8] sm:$0xff]
        %1080 = vmatpush.msra.mxu0 %v1063
        %1081 = vmatpush.msra.mxu0 %v1062
        %1082 = vmatpush.msra.mxu0 %v1061
        %1083 = vmatpush.msra.mxu0 %v1060
        %1084 = vmatpush.msra.mxu0 %v1059
        %1085 = vmatpush.msra.mxu0 %v1058
        %1086 = vmatpush.msra.mxu0 %v1057
        %1087 = vmatpush.msra.mxu0 %v1056
        %1088 = vmatpush.msra.mxu0 %v1055
        %1089 = vmatpush.msra.mxu0 %v1054
        %1090 = vmatpush.msra.mxu0 %v1053
        %1091 = vmatpush.msra.mxu0 %v1052
        %1092 = vmatpush.msra.mxu0 %v1051
        %1093 = vmatpush.msra.mxu0 %v1050
        %1094 = vmatpush.msra.mxu0 %v1049
        %1095 = vmatpush.msra.mxu0 %v1048
        %1096 = vmatmul.f32.gmra.mxu0 %v985
        %v1097 = vpop.f32.mrf.mxu0
        %v1098 = vadd.f32 0.0, %v1097
        %1099 = vmatmul.f32.gmra.mxu0 %v991
        %v1100 = vpop.f32.mrf.mxu0
        %v1101 = vadd.f32 0.0, %v1100
        %1102 = vmatmul.f32.gmra.mxu0 %v997
        %v1103 = vpop.f32.mrf.mxu0
        %v1104 = vadd.f32 0.0, %v1103
        %1105 = vmatmul.f32.gmra.mxu0 %v1003
        %v1106 = vpop.f32.mrf.mxu0
        %v1107 = vadd.f32 0.0, %v1106
        %1108 = vdwg.mxu0
        %1109 = vmatpush.msra.mxu0 %v1079
        %1110 = vmatpush.msra.mxu0 %v1078
        %1111 = vmatpush.msra.mxu0 %v1077
        %1112 = vmatpush.msra.mxu0 %v1076
        %1113 = vmatpush.msra.mxu0 %v1075
        %1114 = vmatpush.msra.mxu0 %v1074
        %1115 = vmatpush.msra.mxu0 %v1073
        %1116 = vmatpush.msra.mxu0 %v1072
        %1117 = vmatpush.msra.mxu0 %v1071
        %1118 = vmatpush.msra.mxu0 %v1070
        %1119 = vmatpush.msra.mxu0 %v1069
        %1120 = vmatpush.msra.mxu0 %v1068
        %1121 = vmatpush.msra.mxu0 %v1067
        %1122 = vmatpush.msra.mxu0 %v1066
        %1123 = vmatpush.msra.mxu0 %v1065
        %1124 = vmatpush.msra.mxu0 %v1064
        %1125 = vmatmul.f32.gmra.mxu0 %v988
        %v1126 = vpop.f32.mrf.mxu0
        %v1127 = vadd.f32 %v1098, %v1126
        %1128 = vmatmul.f32.gmra.mxu0 %v994
        %v1129 = vpop.f32.mrf.mxu0
        %v1130 = vadd.f32 %v1101, %v1129
        %1131 = vmatmul.f32.gmra.mxu0 %v1000
        %v1132 = vpop.f32.mrf.mxu0
        %v1133 = vadd.f32 %v1104, %v1132
        %1134 = vmatmul.f32.gmra.mxu0 %v1006
        %v1135 = vpop.f32.mrf.mxu0
        %v1136 = vadd.f32 %v1107, %v1135
        %1137 = vdwg.mxu0
        %1138 = vmatpush.msra.mxu0 %v1030
        %1139 = vmatpush.msra.mxu0 %v1029
        %1140 = vmatpush.msra.mxu0 %v1028
        %1141 = vmatpush.msra.mxu0 %v1027
        %1142 = vmatpush.msra.mxu0 %v1026
        %1143 = vmatpush.msra.mxu0 %v1025
        %1144 = vmatpush.msra.mxu0 %v1024
        %1145 = vmatpush.msra.mxu0 %v1023
        %1146 = vmatpush.msra.mxu0 %v1022
        %1147 = vmatpush.msra.mxu0 %v1021
        %1148 = vmatpush.msra.mxu0 %v1020
        %1149 = vmatpush.msra.mxu0 %v1019
        %1150 = vmatpush.msra.mxu0 %v1018
        %1151 = vmatpush.msra.mxu0 %v1017
        %1152 = vmatpush.msra.mxu0 %v1016
        %1153 = vmatpush.msra.mxu0 %v1015
        %1154 = vmatmul.f32.gmra.mxu0 %v878
        %v1155 = vpop.f32.mrf.mxu0
        %v1156 = vadd.f32 %v1127, %v1155
        %1157 = vmatmul.f32.gmra.mxu0 %v880
        %v1158 = vpop.f32.mrf.mxu0
        %v1159 = vadd.f32 %v1130, %v1158
        %1160 = vmatmul.f32.gmra.mxu0 %v882
        %v1161 = vpop.f32.mrf.mxu0
        %v1162 = vadd.f32 %v1133, %v1161
        %1163 = vmatmul.f32.gmra.mxu0 %v884
        %v1164 = vpop.f32.mrf.mxu0
        %v1165 = vadd.f32 %v1136, %v1164
        %1166 = vdwg.mxu0
        %1167 = vmatpush.msra.mxu0 %v1046
        %1168 = vmatpush.msra.mxu0 %v1045
        %1169 = vmatpush.msra.mxu0 %v1044
        %1170 = vmatpush.msra.mxu0 %v1043
        %1171 = vmatpush.msra.mxu0 %v1042
        %1172 = vmatpush.msra.mxu0 %v1041
        %1173 = vmatpush.msra.mxu0 %v1040
        %1174 = vmatpush.msra.mxu0 %v1039
        %1175 = vmatpush.msra.mxu0 %v1038
        %1176 = vmatpush.msra.mxu0 %v1037
        %1177 = vmatpush.msra.mxu0 %v1036
        %1178 = vmatpush.msra.mxu0 %v1035
        %1179 = vmatpush.msra.mxu0 %v1034
        %1180 = vmatpush.msra.mxu0 %v1033
        %1181 = vmatpush.msra.mxu0 %v1032
        %1182 = vmatpush.msra.mxu0 %v1031
        %1183 = vmatmul.f32.gmra.mxu0 %v879
        %v1184 = vpop.f32.mrf.mxu0
        %v1185 = vadd.f32 %v1156, %v1184
        %1186 = vmatmul.f32.gmra.mxu0 %v881
        %v1187 = vpop.f32.mrf.mxu0
        %v1188 = vadd.f32 %v1159, %v1187
        %1189 = vmatmul.f32.gmra.mxu0 %v883
        %v1190 = vpop.f32.mrf.mxu0
        %v1191 = vadd.f32 %v1162, %v1190
        %1192 = vmatmul.f32.gmra.mxu0 %v885
        %v1193 = vpop.f32.mrf.mxu0
        %v1194 = vadd.f32 %v1165, %v1193
        %1195 = vdwg.mxu0
        %s1196 = scalar_lea.vmem %s3, 512
        %v1197 = vld [vmem:[%s1196] sm:$0xff]
        %v1198 = vld [vmem:[%s1196 + $0x8] sm:$0xff]
        %v1199 = vld [vmem:[%s1196 + $0x10] sm:$0xff]
        %v1200 = vld [vmem:[%s1196 + $0x18] sm:$0xff]
        %v1201 = vld [vmem:[%s1196 + $0x20] sm:$0xff]
        %v1202 = vld [vmem:[%s1196 + $0x28] sm:$0xff]
        %v1203 = vld [vmem:[%s1196 + $0x30] sm:$0xff]
        %v1204 = vld [vmem:[%s1196 + $0x38] sm:$0xff]
        %v1205 = vld [vmem:[%s1196 + $0x40] sm:$0xff]
        %v1206 = vld [vmem:[%s1196 + $0x48] sm:$0xff]
        %v1207 = vld [vmem:[%s1196 + $0x50] sm:$0xff]
        %v1208 = vld [vmem:[%s1196 + $0x58] sm:$0xff]
        %v1209 = vld [vmem:[%s1196 + $0x60] sm:$0xff]
        %v1210 = vld [vmem:[%s1196 + $0x68] sm:$0xff]
        %v1211 = vld [vmem:[%s1196 + $0x70] sm:$0xff]
        %v1212 = vld [vmem:[%s1196 + $0x78] sm:$0xff]
        %v1213 = vld [vmem:[%s1196 + $0x80] sm:$0xff]
        %v1214 = vld [vmem:[%s1196 + $0x88] sm:$0xff]
        %v1215 = vld [vmem:[%s1196 + $0x90] sm:$0xff]
        %v1216 = vld [vmem:[%s1196 + $0x98] sm:$0xff]
        %v1217 = vld [vmem:[%s1196 + $0xa0] sm:$0xff]
        %v1218 = vld [vmem:[%s1196 + $0xa8] sm:$0xff]
        %v1219 = vld [vmem:[%s1196 + $0xb0] sm:$0xff]
        %v1220 = vld [vmem:[%s1196 + $0xb8] sm:$0xff]
        %v1221 = vld [vmem:[%s1196 + $0xc0] sm:$0xff]
        %v1222 = vld [vmem:[%s1196 + $0xc8] sm:$0xff]
        %v1223 = vld [vmem:[%s1196 + $0xd0] sm:$0xff]
        %v1224 = vld [vmem:[%s1196 + $0xd8] sm:$0xff]
        %v1225 = vld [vmem:[%s1196 + $0xe0] sm:$0xff]
        %v1226 = vld [vmem:[%s1196 + $0xe8] sm:$0xff]
        %v1227 = vld [vmem:[%s1196 + $0xf0] sm:$0xff]
        %v1228 = vld [vmem:[%s1196 + $0xf8] sm:$0xff]
        %1229 = vmatpush.msra.mxu0 %v1212
        %1230 = vmatpush.msra.mxu0 %v1211
        %1231 = vmatpush.msra.mxu0 %v1210
        %1232 = vmatpush.msra.mxu0 %v1209
        %1233 = vmatpush.msra.mxu0 %v1208
        %1234 = vmatpush.msra.mxu0 %v1207
        %1235 = vmatpush.msra.mxu0 %v1206
        %1236 = vmatpush.msra.mxu0 %v1205
        %1237 = vmatpush.msra.mxu0 %v1204
        %1238 = vmatpush.msra.mxu0 %v1203
        %1239 = vmatpush.msra.mxu0 %v1202
        %1240 = vmatpush.msra.mxu0 %v1201
        %1241 = vmatpush.msra.mxu0 %v1200
        %1242 = vmatpush.msra.mxu0 %v1199
        %1243 = vmatpush.msra.mxu0 %v1198
        %1244 = vmatpush.msra.mxu0 %v1197
        %1245 = vmatmul.f32.gmra.mxu0 %v921
        %v1246 = vpop.f32.mrf.mxu0
        %v1247 = vadd.f32 0.0, %v1246
        %1248 = vmatmul.f32.gmra.mxu0 %v927
        %v1249 = vpop.f32.mrf.mxu0
        %v1250 = vadd.f32 0.0, %v1249
        %1251 = vmatmul.f32.gmra.mxu0 %v933
        %v1252 = vpop.f32.mrf.mxu0
        %v1253 = vadd.f32 0.0, %v1252
        %1254 = vmatmul.f32.gmra.mxu0 %v939
        %v1255 = vpop.f32.mrf.mxu0
        %v1256 = vadd.f32 0.0, %v1255
        %1257 = vdwg.mxu0
        %1258 = vmatpush.msra.mxu0 %v1228
        %1259 = vmatpush.msra.mxu0 %v1227
        %1260 = vmatpush.msra.mxu0 %v1226
        %1261 = vmatpush.msra.mxu0 %v1225
        %1262 = vmatpush.msra.mxu0 %v1224
        %1263 = vmatpush.msra.mxu0 %v1223
        %1264 = vmatpush.msra.mxu0 %v1222
        %1265 = vmatpush.msra.mxu0 %v1221
        %1266 = vmatpush.msra.mxu0 %v1220
        %1267 = vmatpush.msra.mxu0 %v1219
        %1268 = vmatpush.msra.mxu0 %v1218
        %1269 = vmatpush.msra.mxu0 %v1217
        %1270 = vmatpush.msra.mxu0 %v1216
        %1271 = vmatpush.msra.mxu0 %v1215
        %1272 = vmatpush.msra.mxu0 %v1214
        %1273 = vmatpush.msra.mxu0 %v1213
        %1274 = vmatmul.f32.gmra.mxu0 %v924
        %v1275 = vpop.f32.mrf.mxu0
        %v1276 = vadd.f32 %v1247, %v1275
        %1277 = vmatmul.f32.gmra.mxu0 %v930
        %v1278 = vpop.f32.mrf.mxu0
        %v1279 = vadd.f32 %v1250, %v1278
        %1280 = vmatmul.f32.gmra.mxu0 %v936
        %v1281 = vpop.f32.mrf.mxu0
        %v1282 = vadd.f32 %v1253, %v1281
        %1283 = vmatmul.f32.gmra.mxu0 %v942
        %v1284 = vpop.f32.mrf.mxu0
        %v1285 = vadd.f32 %v1256, %v1284
        %1286 = vdwg.mxu0
        %v1287 = vadd.f32 %v1185, %v1276
        %v1288 = vadd.f32 %v1188, %v1279
        %v1289 = vadd.f32 %v1191, %v1282
        %v1290 = vadd.f32 %v1194, %v1285
        %v1291 = vld [vmem:[%s4] sm:$0x1]
        %v1293 = vperm.slane %v1291, 0
        %v1295 = vadd.f32 %v1287, %v1293
        %v1296 = vadd.f32 %v1288, %v1293
        %v1297 = vadd.f32 %v1289, %v1293
        %v1298 = vadd.f32 %v1290, %v1293
        %v1299 = vmax.f32 %v1295, 0.0
        %v1300 = vmax.f32 %v1296, 0.0
        %v1301 = vmax.f32 %v1297, 0.0
        %v1302 = vmax.f32 %v1298, 0.0
        %1303 = vst [vmem:[#allocation3] sm:$0x2] %v1299
        %1304 = vst [vmem:[#allocation3 + $0x10] sm:$0x2] %v1300
        %1305 = vst [vmem:[#allocation3 + $0x20] sm:$0x2] %v1301
        %1306 = vst [vmem:[#allocation3 + $0x30] sm:$0x2] %v1302
        %1307 = vst [vmem:[#allocation3 + $0x5] sm:$0x1] %v1299
        %1308 = vst [vmem:[#allocation3 + $0x15] sm:$0x1] %v1300
        %1309 = vst [vmem:[#allocation3 + $0x25] sm:$0x1] %v1301
        %1310 = vst [vmem:[#allocation3 + $0x35] sm:$0x1] %v1302
        %1311 = vst [vmem:[#allocation3 - $0x1] sm:$0x8] %v1299
        %1312 = vst [vmem:[#allocation3 + $0xf] sm:$0x8] %v1300
        %1313 = vst [vmem:[#allocation3 + $0x1f] sm:$0x8] %v1301
        %1314 = vst [vmem:[#allocation3 + $0x2f] sm:$0x8] %v1302
        %1315 = vst [vmem:[#allocation3 + $0x4] sm:$0x4] %v1299
        %1316 = vst [vmem:[#allocation3 + $0x14] sm:$0x4] %v1300
        %1317 = vst [vmem:[#allocation3 + $0x24] sm:$0x4] %v1301
        %1318 = vst [vmem:[#allocation3 + $0x34] sm:$0x4] %v1302
        %1319 = vst [vmem:[#allocation3 - $0x2] sm:$0x20] %v1299
        %1320 = vst [vmem:[#allocation3 + $0xe] sm:$0x20] %v1300
        %1321 = vst [vmem:[#allocation3 + $0x1e] sm:$0x20] %v1301
        %1322 = vst [vmem:[#allocation3 + $0x2e] sm:$0x20] %v1302
        %1323 = vst [vmem:[#allocation3 + $0x3] sm:$0x10] %v1299
        %1324 = vst [vmem:[#allocation3 + $0x13] sm:$0x10] %v1300
        %1325 = vst [vmem:[#allocation3 + $0x23] sm:$0x10] %v1301
        %1326 = vst [vmem:[#allocation3 + $0x33] sm:$0x10] %v1302
        %1327 = vst [vmem:[#allocation3 - $0x3] sm:$0x80] %v1299
        %1328 = vst [vmem:[#allocation3 + $0xd] sm:$0x80] %v1300
        %1329 = vst [vmem:[#allocation3 + $0x1d] sm:$0x80] %v1301
        %1330 = vst [vmem:[#allocation3 + $0x2d] sm:$0x80] %v1302
        %1331 = vst [vmem:[#allocation3 + $0x2] sm:$0x40] %v1299
        %1332 = vst [vmem:[#allocation3 + $0x12] sm:$0x40] %v1300
        %1333 = vst [vmem:[#allocation3 + $0x22] sm:$0x40] %v1301
        %1334 = vst [vmem:[#allocation3 + $0x32] sm:$0x40] %v1302
        %v1335 = vld [vmem:[#allocation3] sm:$0xf]
        %v1336 = vld [vmem:[#allocation3 + $0x10] sm:$0xf]
        %v1337 = vld [vmem:[#allocation3 + $0x20] sm:$0xf]
        %v1338 = vld [vmem:[#allocation3 + $0x30] sm:$0xf]
        %v1339 = vld [vmem:[#allocation3 + $0x1] sm:$0xf]
        %v1340 = vld [vmem:[#allocation3 + $0x11] sm:$0xf]
        %v1341 = vld [vmem:[#allocation3 + $0x21] sm:$0xf]
        %v1342 = vld [vmem:[#allocation3 + $0x31] sm:$0xf]
        %v1343 = vld [vmem:[#allocation3 + $0x5] sm:$0xf]
        %v1344 = vld [vmem:[#allocation3 + $0x15] sm:$0xf]
        %v1345 = vld [vmem:[#allocation3 + $0x25] sm:$0xf]
        %v1346 = vld [vmem:[#allocation3 + $0x35] sm:$0xf]
        %v1347 = vld [vmem:[%s5] sm:$0xff]
        %v1348 = vld [vmem:[%s5 + $0x8] sm:$0xff]
        %v1349 = vld [vmem:[%s5 + $0x10] sm:$0xff]
        %v1350 = vld [vmem:[%s5 + $0x18] sm:$0xff]
        %v1351 = vld [vmem:[%s5 + $0x20] sm:$0xff]
        %v1352 = vld [vmem:[%s5 + $0x28] sm:$0xff]
        %v1353 = vld [vmem:[%s5 + $0x30] sm:$0xff]
        %v1354 = vld [vmem:[%s5 + $0x38] sm:$0xff]
        %v1355 = vld [vmem:[%s5 + $0x40] sm:$0xff]
        %v1356 = vld [vmem:[%s5 + $0x48] sm:$0xff]
        %v1357 = vld [vmem:[%s5 + $0x50] sm:$0xff]
        %v1358 = vld [vmem:[%s5 + $0x58] sm:$0xff]
        %v1359 = vld [vmem:[%s5 + $0x60] sm:$0xff]
        %v1360 = vld [vmem:[%s5 + $0x68] sm:$0xff]
        %v1361 = vld [vmem:[%s5 + $0x70] sm:$0xff]
        %v1362 = vld [vmem:[%s5 + $0x78] sm:$0xff]
        %s1363 = scalar_lea.vmem %s5, 128
        %v1364 = vld [vmem:[%s1363] sm:$0xff]
        %v1365 = vld [vmem:[%s1363 + $0x8] sm:$0xff]
        %v1366 = vld [vmem:[%s1363 + $0x10] sm:$0xff]
        %v1367 = vld [vmem:[%s1363 + $0x18] sm:$0xff]
        %v1368 = vld [vmem:[%s1363 + $0x20] sm:$0xff]
        %v1369 = vld [vmem:[%s1363 + $0x28] sm:$0xff]
        %v1370 = vld [vmem:[%s1363 + $0x30] sm:$0xff]
        %v1371 = vld [vmem:[%s1363 + $0x38] sm:$0xff]
        %v1372 = vld [vmem:[%s1363 + $0x40] sm:$0xff]
        %v1373 = vld [vmem:[%s1363 + $0x48] sm:$0xff]
        %v1374 = vld [vmem:[%s1363 + $0x50] sm:$0xff]
        %v1375 = vld [vmem:[%s1363 + $0x58] sm:$0xff]
        %v1376 = vld [vmem:[%s1363 + $0x60] sm:$0xff]
        %v1377 = vld [vmem:[%s1363 + $0x68] sm:$0xff]
        %v1378 = vld [vmem:[%s1363 + $0x70] sm:$0xff]
        %v1379 = vld [vmem:[%s1363 + $0x78] sm:$0xff]
        %1384 = vst [vmem:[#allocation1] ss:$2 sm:$0xff] %v1343
        %s1385 = scalar_lea.vmem [#allocation1], 1
        %1386 = vst [vmem:[%s1385] ss:$2 sm:$0xff] %v1344
        %s1387 = scalar_lea.vmem [#allocation1], 16
        %1388 = vst [vmem:[%s1387] ss:$2 sm:$0xff] %v1345
        %s1389 = scalar_lea.vmem [#allocation1], 17
        %1390 = vst [vmem:[%s1389] ss:$2 sm:$0xff] %v1346
        %v1391 = vld.sshfl [vmem:[#allocation1] sm:$0xff pattern:$0x75316420]
        %v1392 = vld.sshfl [vmem:[#allocation1 + $0x10] sm:$0xff pattern:$0x75316420]
        %1395 = vmatpush.msra.mxu0 %v1379
        %1396 = vmatpush.msra.mxu0 %v1378
        %1397 = vmatpush.msra.mxu0 %v1377
        %1398 = vmatpush.msra.mxu0 %v1376
        %1399 = vmatpush.msra.mxu0 %v1375
        %1400 = vmatpush.msra.mxu0 %v1374
        %1401 = vmatpush.msra.mxu0 %v1373
        %1402 = vmatpush.msra.mxu0 %v1372
        %1403 = vmatpush.msra.mxu0 %v1371
        %1404 = vmatpush.msra.mxu0 %v1370
        %1405 = vmatpush.msra.mxu0 %v1369
        %1406 = vmatpush.msra.mxu0 %v1368
        %1407 = vmatpush.msra.mxu0 %v1367
        %1408 = vmatpush.msra.mxu0 %v1366
        %1409 = vmatpush.msra.mxu0 %v1365
        %1410 = vmatpush.msra.mxu0 %v1364
        %1411 = vmatmul.f32.gmra.mxu0 %v1391
        %v1412 = vpop.f32.mrf.mxu0
        %v1413 = vadd.f32 0.0, %v1412
        %1414 = vmatmul.f32.gmra.mxu0 %v1392
        %v1415 = vpop.f32.mrf.mxu0
        %v1416 = vadd.f32 0.0, %v1415
        %1417 = vdwg.mxu0
        %1422 = vst [vmem:[#allocation1] ss:$2 sm:$0xff] %v1335
        %s1423 = scalar_lea.vmem [#allocation1], 1
        %1424 = vst [vmem:[%s1423] ss:$2 sm:$0xff] %v1336
        %s1425 = scalar_lea.vmem [#allocation1], 16
        %1426 = vst [vmem:[%s1425] ss:$2 sm:$0xff] %v1337
        %s1427 = scalar_lea.vmem [#allocation1], 17
        %1428 = vst [vmem:[%s1427] ss:$2 sm:$0xff] %v1338
        %v1429 = vld.sshfl [vmem:[#allocation1] sm:$0xff pattern:$0x75316420]
        %v1430 = vld.sshfl [vmem:[#allocation1 + $0x10] sm:$0xff pattern:$0x75316420]
        %1433 = vmatpush.msra.mxu0 %v1362
        %1434 = vmatpush.msra.mxu0 %v1361
        %1435 = vmatpush.msra.mxu0 %v1360
        %1436 = vmatpush.msra.mxu0 %v1359
        %1437 = vmatpush.msra.mxu0 %v1358
        %1438 = vmatpush.msra.mxu0 %v1357
        %1439 = vmatpush.msra.mxu0 %v1356
        %1440 = vmatpush.msra.mxu0 %v1355
        %1441 = vmatpush.msra.mxu0 %v1354
        %1442 = vmatpush.msra.mxu0 %v1353
        %1443 = vmatpush.msra.mxu0 %v1352
        %1444 = vmatpush.msra.mxu0 %v1351
        %1445 = vmatpush.msra.mxu0 %v1350
        %1446 = vmatpush.msra.mxu0 %v1349
        %1447 = vmatpush.msra.mxu0 %v1348
        %1448 = vmatpush.msra.mxu0 %v1347
        %1449 = vmatmul.f32.gmra.mxu0 %v1429
        %v1450 = vpop.f32.mrf.mxu0
        %v1451 = vadd.f32 %v1413, %v1450
        %1452 = vmatmul.f32.gmra.mxu0 %v1430
        %v1453 = vpop.f32.mrf.mxu0
        %v1454 = vadd.f32 %v1416, %v1453
        %1455 = vdwg.mxu0
        %s1456 = scalar_lea.vmem %s5, 256
        %v1457 = vld [vmem:[%s1456] sm:$0xff]
        %v1458 = vld [vmem:[%s1456 + $0x8] sm:$0xff]
        %v1459 = vld [vmem:[%s1456 + $0x10] sm:$0xff]
        %v1460 = vld [vmem:[%s1456 + $0x18] sm:$0xff]
        %v1461 = vld [vmem:[%s1456 + $0x20] sm:$0xff]
        %v1462 = vld [vmem:[%s1456 + $0x28] sm:$0xff]
        %v1463 = vld [vmem:[%s1456 + $0x30] sm:$0xff]
        %v1464 = vld [vmem:[%s1456 + $0x38] sm:$0xff]
        %v1465 = vld [vmem:[%s1456 + $0x40] sm:$0xff]
        %v1466 = vld [vmem:[%s1456 + $0x48] sm:$0xff]
        %v1467 = vld [vmem:[%s1456 + $0x50] sm:$0xff]
        %v1468 = vld [vmem:[%s1456 + $0x58] sm:$0xff]
        %v1469 = vld [vmem:[%s1456 + $0x60] sm:$0xff]
        %v1470 = vld [vmem:[%s1456 + $0x68] sm:$0xff]
        %v1471 = vld [vmem:[%s1456 + $0x70] sm:$0xff]
        %v1472 = vld [vmem:[%s1456 + $0x78] sm:$0xff]
        %1477 = vst [vmem:[#allocation1] ss:$2 sm:$0xff] %v1339
        %s1478 = scalar_lea.vmem [#allocation1], 1
        %1479 = vst [vmem:[%s1478] ss:$2 sm:$0xff] %v1340
        %s1480 = scalar_lea.vmem [#allocation1], 16
        %1481 = vst [vmem:[%s1480] ss:$2 sm:$0xff] %v1341
        %s1482 = scalar_lea.vmem [#allocation1], 17
        %1483 = vst [vmem:[%s1482] ss:$2 sm:$0xff] %v1342
        %v1484 = vld.sshfl [vmem:[#allocation1] sm:$0xff pattern:$0x75316420]
        %v1485 = vld.sshfl [vmem:[#allocation1 + $0x10] sm:$0xff pattern:$0x75316420]
        %1488 = vmatpush.msra.mxu0 %v1472
        %1489 = vmatpush.msra.mxu0 %v1471
        %1490 = vmatpush.msra.mxu0 %v1470
        %1491 = vmatpush.msra.mxu0 %v1469
        %1492 = vmatpush.msra.mxu0 %v1468
        %1493 = vmatpush.msra.mxu0 %v1467
        %1494 = vmatpush.msra.mxu0 %v1466
        %1495 = vmatpush.msra.mxu0 %v1465
        %1496 = vmatpush.msra.mxu0 %v1464
        %1497 = vmatpush.msra.mxu0 %v1463
        %1498 = vmatpush.msra.mxu0 %v1462
        %1499 = vmatpush.msra.mxu0 %v1461
        %1500 = vmatpush.msra.mxu0 %v1460
        %1501 = vmatpush.msra.mxu0 %v1459
        %1502 = vmatpush.msra.mxu0 %v1458
        %1503 = vmatpush.msra.mxu0 %v1457
        %1504 = vmatmul.f32.gmra.mxu0 %v1484
        %v1505 = vpop.f32.mrf.mxu0
        %v1506 = vadd.f32 0.0, %v1505
        %1507 = vmatmul.f32.gmra.mxu0 %v1485
        %v1508 = vpop.f32.mrf.mxu0
        %v1509 = vadd.f32 0.0, %v1508
        %1510 = vdwg.mxu0
        %v1511 = vadd.f32 %v1451, %v1506
        %v1512 = vadd.f32 %v1454, %v1509
        %v1513 = vld [vmem:[%s6] sm:$0x1]
        %v1515 = vperm.slane %v1513, 0
        %v1517 = vadd.f32 %v1511, %v1515
        %v1518 = vadd.f32 %v1512, %v1515
        %v1519 = vmax.f32 %v1517, 0.0
        %v1520 = vmax.f32 %v1518, 0.0
        %v1523 = vrot.slane %v1519, 4
        %v1524 = vrot.slane %v1520, 4
        %vm1527 = vcmask 322560
        %v1528 = vsel %vm1527, %v1519, 0.0
        %v1529 = vrot.slane %v1528, 4
        %v1530 = vadd.f32 %v1528, %v1529
        %v1531 = vrot.slane %v1530, 2
        %v1532 = vadd.f32 %v1530, %v1531
        %v1533 = vrot.slane %v1532, 1
        %v1534 = vadd.f32 %v1532, %v1533
        %v1535 = vsel %vm1527, %v1523, 0.0
        %v1536 = vrot.slane %v1535, 4
        %v1537 = vadd.f32 %v1535, %v1536
        %v1538 = vrot.slane %v1537, 2
        %v1539 = vadd.f32 %v1537, %v1538
        %v1540 = vrot.slane %v1539, 1
        %v1541 = vadd.f32 %v1539, %v1540
        %v1542 = vsel %vm1527, %v1520, 0.0
        %v1543 = vrot.slane %v1542, 4
        %v1544 = vadd.f32 %v1542, %v1543
        %v1545 = vrot.slane %v1544, 2
        %v1546 = vadd.f32 %v1544, %v1545
        %v1547 = vrot.slane %v1546, 1
        %v1548 = vadd.f32 %v1546, %v1547
        %v1549 = vsel %vm1527, %v1524, 0.0
        %v1550 = vrot.slane %v1549, 4
        %v1551 = vadd.f32 %v1549, %v1550
        %v1552 = vrot.slane %v1551, 2
        %v1553 = vadd.f32 %v1551, %v1552
        %v1554 = vrot.slane %v1553, 1
        %v1555 = vadd.f32 %v1553, %v1554
        %v1556 = vld [vmem:[%s7] sm:$0xff]
        %v1557 = vld [vmem:[%s7 + $0x8] sm:$0xff]
        %v1558 = vld [vmem:[%s7 + $0x10] sm:$0xff]
        %v1559 = vld [vmem:[%s7 + $0x18] sm:$0xff]
        %v1560 = vld [vmem:[%s7 + $0x20] sm:$0xff]
        %v1561 = vld [vmem:[%s8] sm:$0x1]
        %v1563 = vperm.slane %v1561, 0
        %vm1569 = vcmask 1041409
        %v1570 = vsel %vm1569, %v1541, %v1534
        %vm1571 = vcmask 1042434
        %v1572 = vsel %vm1571, %v1548, %v1570
        %vm1573 = vcmask 1043459
        %v1574 = vsel %vm1573, %v1555, %v1572
        %vm1575 = vcmask 326656
        %v1576 = vsel %vm1575, %v1574, 0
        %1578 = vmatpush.msra.mxu0 0.0
        %1579 = vmatpush.msra.mxu0 0.0
        %1580 = vmatpush.msra.mxu0 0.0
        %1581 = vmatpush.msra.mxu0 0.0
        %1582 = vmatpush.msra.mxu0 0.0
        %1583 = vmatpush.msra.mxu0 0.0
        %1584 = vmatpush.msra.mxu0 0.0
        %1585 = vmatpush.msra.mxu0 0.0
        %1586 = vmatpush.msra.mxu0 0.0
        %1587 = vmatpush.msra.mxu0 0.0
        %1588 = vmatpush.msra.mxu0 0.0
        %1589 = vmatpush.msra.mxu0 %v1560
        %1590 = vmatpush.msra.mxu0 %v1559
        %1591 = vmatpush.msra.mxu0 %v1558
        %1592 = vmatpush.msra.mxu0 %v1557
        %1593 = vmatpush.msra.mxu0 %v1556
        %1594 = vmatmul.f32.gmra.mxu0 %v1576
        %v1595 = vpop.f32.mrf.mxu0
        %v1596 = vadd.f32 %v1563, %v1595
        %1597 = vdwg.mxu0
        %v1598 = vmax.f32 %v1596, 0.0
        %v1599 = vld [vmem:[%s9] sm:$0xff]
        %v1600 = vld [vmem:[%s9 + $0x8] sm:$0xff]
        %v1601 = vld [vmem:[%s10] sm:$0x1]
        %v1603 = vperm.slane %v1601, 0
        %vm1605 = vcmask 130048
        %v1607 = vsel %vm1605, %v1598, 0
        %1609 = vmatpush.msra.mxu0 0.0
        %1610 = vmatpush.msra.mxu0 0.0
        %1611 = vmatpush.msra.mxu0 0.0
        %1612 = vmatpush.msra.mxu0 0.0
        %1613 = vmatpush.msra.mxu0 0.0
        %1614 = vmatpush.msra.mxu0 0.0
        %1615 = vmatpush.msra.mxu0 0.0
        %1616 = vmatpush.msra.mxu0 0.0
        %1617 = vmatpush.msra.mxu0 0.0
        %1618 = vmatpush.msra.mxu0 0.0
        %1619 = vmatpush.msra.mxu0 0.0
        %1620 = vmatpush.msra.mxu0 0.0
        %1621 = vmatpush.msra.mxu0 0.0
        %1622 = vmatpush.msra.mxu0 0.0
        %1623 = vmatpush.msra.mxu0 %v1600
        %1624 = vmatpush.msra.mxu0 %v1599
        %1625 = vmatmul.f32.gmra.mxu0 %v1607
        %v1626 = vpop.f32.mrf.mxu0
        %v1627 = vadd.f32 %v1603, %v1626
        %1628 = vdwg.mxu0
        %1629 = vst [vmem:[%s382] sm:$0xf] %v1627
        %s1630 = sand.u32 %s269, 1
        %s1631 = scalar_lea.sflag [#allocation5], %s1630
        %s1632 = sand.u32 %s269, 1
        %s1633 = smul.addr %s1632, 4
        %s1634 = scalar_lea.vmem [#allocation4], %s1633
        // Predicated region
        $region65: #{convnet_forward.1} parent=63 // pred_check
          %p1635 = pneg %p279
        $region66: #{convnet_forward.1} parent=63 // pred_check_branch
          %1637 = sbr.rel (%p1635) target = $region68
        $region67: #{convnet_forward.1} parent=63 // pred_region
          %1639 = vsyncadd %s1631, 0
          %s1640 = smul.addr %s25, 4
          %s1641 = scalar_lea.hbm %s11, %s1640
          %s1643 = sshll.u32 %s1634, 4
          %s1644 = int_to_ptr.vmem [resolvable:$true] %s1643
          %s1645 = sshll.u32 %s1641, 4
          %s1646 = int_to_ptr.hbm [resolvable:$true] %s1645
          %1648 = dma.vmem_to_hbm [thread:$0]  %s1644, 64, %s1646, %s1631
        $region68: #{convnet_forward.1} parent=63 // pred_fallthru
          _
      $region64: #{convnet_forward.1} parent=5 // pred_fallthru
        _
      %p1649 = scmp.le.s32.totalorder 2, %s20
      // Predicated region
      $region69: #{convnet_forward.1} parent=5 // pred_check
        %p1650 = pneg %p1649
      $region70: #{convnet_forward.1} parent=5 // pred_check_branch
        %1652 = sbr.rel (%p1650) target = $region72
      $region71: #{convnet_forward.1} parent=5 // pred_region
        %s1653 = ssub.s32 %s20, 2
        // Predicated region
        $region73: #{convnet_forward.1} parent=71 // pred_check
          %p1654 = pneg %p285
        $region74: #{convnet_forward.1} parent=71 // pred_check_branch
          %1656 = sbr.rel (%p1654) target = $region76
        $region75: #{convnet_forward.1} parent=71 // pred_region
          %s1657 = sand.u32 %s270, 1
          %s1658 = scalar_lea.sflag [#allocation5], %s1657
          %s1659 = sand.u32 %s270, 1
          %s1660 = smul.addr %s1659, 4
          %s1661 = scalar_lea.vmem [#allocation4], %s1660
          %1663 = dma.done %s1658, 64
        $region76: #{convnet_forward.1} parent=71 // pred_fallthru
          _
      $region72: #{convnet_forward.1} parent=5 // pred_fallthru
        _
    $region6: #{convnet_forward.1} parent=1 // loop_footer
      %s24 = sadd.s32 1, %s20
    $region7: #{convnet_forward.1} parent=1 // loop_footer_branch
      %19 = sbr.rel target = $region3
    $region8: #{convnet_forward.1} parent=1 // loop_exit
      _
    %1664 = vsyncpa [#allocation5], 1
    %s1665 = scalar_lea.sflag [#allocation5], 1
    %1666 = vsyncpa %s1665, 1

</llo_original>
